<compile_context>
chip_gen: v6e
topology: v6e:2x2x1
jax: 0.10.0
libtpu: 0.0.40
codegen_flags: <defaults>
</compile_context>

<pallas_src>
import functools

import numpy as np
import jax
import jax.numpy as jnp
from jax.experimental import pallas as pl
from jax.experimental.pallas import tpu as pltpu

EPS = 1e-5


# ----------------------------------------------------------------------------
# Kernel 1: MelResNet on a flattened, lane-dense (C, B*T') slab
# ----------------------------------------------------------------------------
def melresnet_kernel(x0_ref, w_in_ref, g0_ref, b0_ref,
                     w1s_ref, g1s_ref, b1s_ref,
                     w2s_ref, g2s_ref, b2s_ref,
                     wout_ref, bout_ref, out_ref, *, n_valid):
    n_res = w1s_ref.shape[0]
    n_pad = x0_ref.shape[1]
    n_extra = float(n_pad - n_valid)          # number of zero-padded lanes
    inv_n = 1.0 / float(n_valid)

    def batch_norm(x, pad_val, gamma, beta):
        # One-pass training-mode BatchNorm1d (biased stats over batch*time).
        # Padded columns (col >= n_valid) all hold the per-row constant `pad_val`,
        # so the statistics are corrected analytically on (C,1) vectors instead of
        # masking the full slab (saves a VPU slab pass per BN).
        s1 = jnp.sum(x, axis=1, keepdims=True) - n_extra * pad_val
        s2 = jnp.sum(x * x, axis=1, keepdims=True) - n_extra * (pad_val * pad_val)
        mean = s1 * inv_n
        var = s2 * inv_n - mean * mean
        scale = gamma * jax.lax.rsqrt(var + EPS)
        shift = beta - mean * scale
        return x * scale + shift, pad_val * scale + shift

    # conv_in: one im2col matmul (default MXU precision per perf review)
    x = jnp.dot(w_in_ref[...], x0_ref[...], preferred_element_type=jnp.float32)
    pad_val = jnp.zeros((x.shape[0], 1), jnp.float32)   # padded input cols are 0
    x, pad_val = batch_norm(x, pad_val, g0_ref[...], b0_ref[...])
    x = jnp.maximum(x, 0.0)
    pad_val = jnp.maximum(pad_val, 0.0)

    def res_block(i, carry):
        x, pad_val = carry
        h = jnp.dot(w1s_ref[i], x, preferred_element_type=jnp.float32)
        hp = jnp.dot(w1s_ref[i], pad_val, preferred_element_type=jnp.float32)
        h, hp = batch_norm(h, hp, g1s_ref[i], b1s_ref[i])
        h = jnp.maximum(h, 0.0)
        hp = jnp.maximum(hp, 0.0)
        h = jnp.dot(w2s_ref[i], h, preferred_element_type=jnp.float32)
        hp = jnp.dot(w2s_ref[i], hp, preferred_element_type=jnp.float32)
        h, hp = batch_norm(h, hp, g2s_ref[i], b2s_ref[i])
        return x + h, pad_val + hp

    x, pad_val = jax.lax.fori_loop(0, n_res, res_block, (x, pad_val))

    # conv_out: 1x1 conv with bias -> lane-dense (R, n_pad) output slab
    out_ref[...] = (jnp.dot(wout_ref[...], x, preferred_element_type=jnp.float32)
                    + bout_ref[...])


def melresnet_pallas(m, params):
    (w_in, g0, b0, w1s, g1s, b1s, w2s, g2s, b2s, w_out, b_out) = params
    batch, d_in, t_in = m.shape
    k, c_dims, _ = w_in.shape
    r_dims = w_out.shape[0]
    t_res = t_in - (k - 1)
    n = batch * t_res
    n_pad = ((n + 127) // 128) * 128

    # host-side im2col of the (small, pre-stretch) mel input:
    #   row j*d_in + d , col b*t_res + t  ->  m[b, d, t + j]
    x0 = jnp.concatenate([m[:, :, j:j + t_res] for j in range(k)], axis=1)
    x0 = jnp.transpose(x0, (1, 0, 2)).reshape(k * d_in, n)
    x0 = jnp.pad(x0, ((0, 0), (0, n_pad - n)))
    w_in_flat = jnp.transpose(w_in, (1, 0, 2)).reshape(c_dims, k * d_in)

    vspec = lambda: pl.BlockSpec(memory_space=pltpu.MemorySpace.VMEM)
    out = pl.pallas_call(
        functools.partial(melresnet_kernel, n_valid=n),
        out_shape=jax.ShapeDtypeStruct((r_dims, n_pad), jnp.float32),
        in_specs=[vspec() for _ in range(12)],
        out_specs=vspec(),
        # 32 MiB scoped VMEM is safe on every generation (v5e/v6e/v7x).
        compiler_params=pltpu.CompilerParams(vmem_limit_bytes=32 * 1024 * 1024),
    )(x0, w_in_flat, g0, b0, w1s, g1s, b1s, w2s, g2s, b2s, w_out, b_out)
    return out[:, :n]                       # (R, B*t_res), col = b*t_res + t


# ----------------------------------------------------------------------------
# Kernel 2: fused Stretch2d + smoothing conv (and plain Stretch2d) as ONE small
#           structured matmul per (row_block, time_block) producing a lane-dense
#           stretched output block.
# ----------------------------------------------------------------------------
def stretch_matmul_kernel(x_ref, rmat_ref, out_ref, *, tb, kb, nt):
    if nt == 1:
        xs = x_ref[...]                              # whole (rb, kb) slab
    else:
        start = pl.multiple_of(pl.program_id(1) * tb, tb)   # tb-aligned lane start
        xs = x_ref[:, pl.ds(start, kb)]
    out_ref[...] = jnp.dot(xs, rmat_ref[...], preferred_element_type=jnp.float32)


def _smooth_coeffs(conv_w, scale):
    """Closed form of (nearest-neighbour stretch by `scale`) followed by a width
    2*scale+1 conv with zero padding `scale`:
        y[c*scale + q] = A[q]*x[c-1] + B[q]*x[c] + C[q]*x[c+1].
    Exact for arbitrary conv weights (not only the constant 1/(2s+1) init)."""
    w = np.asarray(conv_w, np.float32).reshape(-1)
    s = scale
    assert w.shape[0] == 2 * s + 1
    a = np.array([w[:s - q].sum() for q in range(s)], np.float32)
    b = np.array([w[s - q:2 * s - q].sum() for q in range(s)], np.float32)
    c = np.array([w[2 * s - q:].sum() for q in range(s)], np.float32)
    return [a, b, c]


def _build_combined_matrix(coeffs, tb, scale):
    """Single combined structured matrix (kb, tb*scale) with
    M[c + w, c*scale + q] = coeffs[w][q]  (all windows folded along K)."""
    n_win = len(coeffs)
    kb = tb + n_win - 1
    mat = np.zeros((kb, tb * scale), np.float32)
    cols = np.arange(tb)
    for w, coef in enumerate(coeffs):
        for q in range(scale):
            mat[cols + w, cols * scale + q] += coef[q]
    return jnp.asarray(mat)


def _pick_time_block(t, scale):
    """tb ~128-256 keeps redundant MXU work and rmat VMEM bounded; for nt>1 the
    time axis is padded so tb (a 128 multiple) always divides it -> unmasked,
    lane-dense output stores and 128-aligned dynamic slice starts."""
    if t <= 128:
        return t, t
    tb = 256 if (t > 256 and scale * 256 <= 1024) else 128
    t_pad = -(-t // tb) * tb
    return tb, t_pad


def _pick_row_block(n_rows, rows_block):
    if rows_block is not None:
        rb = rows_block
    elif n_rows % 8 != 0 or n_rows < 16:
        rb = n_rows
    else:
        # multiple of 8, <= 256 (MXU M width on v6e/v7x), and nr >= 2 so both v7x
        # TensorCores get work.
        cap = min(256, n_rows // 2)
        cap -= cap % 8
        rb = 8
        for d in range(cap, 7, -8):
            if n_rows % d == 0:
                rb = d
                break
    assert n_rows % rb == 0 and (rb == n_rows or rb % 8 == 0)
    return rb


def _stretch_matmul(x2d, coeffs, scale, *, rows_block=None):
    n_win = len(coeffs)
    n_rows, width = x2d.shape
    t = width - (n_win - 1)                 # pre-stretch positions producing output

    tb, t_pad = _pick_time_block(t, scale)
    if t_pad > t:
        x2d = jnp.pad(x2d, ((0, 0), (0, t_pad - t)))
    nt = t_pad // tb
    kb = tb + n_win - 1
    rb = _pick_row_block(n_rows, rows_block)
    nr = n_rows // rb

    rmat = _build_combined_matrix(coeffs, tb, scale)     # (kb, tb*scale)
    width_in = x2d.shape[1]                              # t_pad + n_win - 1

    # TODO(synk): on v7x, halo time tiles for x (instead of the resident (rb, width)
    #             row slab) would cap x VMEM at rb*(tb+2)*4 for very long sequences.
    out = pl.pallas_call(
        functools.partial(stretch_matmul_kernel, tb=tb, kb=kb, nt=nt),
        out_shape=jax.ShapeDtypeStruct((n_rows, t_pad * scale), jnp.float32),
        grid=(nr, nt),
        in_specs=[
            pl.BlockSpec((rb, width_in), lambda i, j: (i, 0)),
            pl.BlockSpec((kb, tb * scale), lambda i, j: (0, 0)),
        ],
        out_specs=pl.BlockSpec((rb, tb * scale), lambda i, j: (i, j)),
        compiler_params=pltpu.CompilerParams(
            dimension_semantics=("parallel", "parallel"),
            vmem_limit_bytes=32 * 1024 * 1024),
    )(x2d, rmat)
    if t_pad > t:
        out = out[:, :t * scale]
    return out


def stretch_smooth_pallas(x2d, scale, conv_w, *, rows_block=None):
    """Fused Stretch2d(scale, 1) + Conv2d(1, 1, (1, 2*scale+1), padding=(0, scale),
    bias=False)."""
    xpad = jnp.pad(x2d, ((0, 0), (1, 1)))     # 1-column halo on the SMALL input
    return _stretch_matmul(xpad, _smooth_coeffs(conv_w, scale), scale,
                           rows_block=rows_block)


def stretch_repeat_pallas(x2d, scale, *, rows_block=None):
    """Stretch2d(scale, 1): nearest-neighbour repeat along time (resnet_stretch)."""
    return _stretch_matmul(x2d, [np.ones((scale,), np.float32)], scale,
                           rows_block=rows_block)


# ----------------------------------------------------------------------------
# Full UpsampleNetwork.forward
# ----------------------------------------------------------------------------
def upsample_network_forward(m, params, upsample_scales, pad,
                             up_conv_weights=None, rows_block=None):
    (w_in, g0, b0, w1s, g1s, b1s, w2s, g2s, b2s, w_out, b_out) = params
    batch, feat_dims, t_in = m.shape
    k = w_in.shape[0]
    t_res = t_in - (k - 1)                      # == t_in - 2*pad
    r_dims = w_out.shape[0]
    total = int(np.prod(upsample_scales))
    indent = pad * total

    if up_conv_weights is None:                 # module init: constant 1/(2s+1)
        up_conv_weights = [np.full((2 * s + 1,), 1.0 / (2 * s + 1), np.float32)
                           for s in upsample_scales]

    # ---- MelResNet + resnet_stretch (aux path) ----
    aux = melresnet_pallas(m, params)           # (R, B*t_res)
    aux = aux.reshape(r_dims * batch, t_res)    # row = r*B + b
    aux = stretch_repeat_pallas(aux, total, rows_block=rows_block)
    aux = aux.reshape(r_dims, batch, t_res * total)
    aux = jnp.transpose(aux, (1, 2, 0))         # (B, t_res*total, R)  (module layout)

    # ---- conditioning path: per-scale fused stretch + smoothing conv ----
    x = m.reshape(batch * feat_dims, t_in)
    for s, w in zip(upsample_scales, up_conv_weights):
        x = stretch_smooth_pallas(x, s, w, rows_block=rows_block)
    x = x.reshape(batch, feat_dims, t_in * total)
    if indent > 0:                              # guard empty slice when indent == 0
        x = x[:, :, indent:x.shape[-1] - indent]
    x = jnp.transpose(x, (0, 2, 1))             # (B, (t_in-2*pad)*total, D)
    return x, aux


# ----------------------------------------------------------------------------
# Pure-JAX reference (same math) used as a correctness check
# ----------------------------------------------------------------------------
def upsample_network_ref(m, params, upsample_scales, pad, up_conv_weights=None):
    (w_in, g0, b0, w1s, g1s, b1s, w2s, g2s, b2s, w_out, b_out) = params
    k = w_in.shape[0]
    t_res = m.shape[-1] - (k - 1)
    total = int(np.prod(upsample_scales))
    indent = pad * total
    if up_conv_weights is None:
        up_conv_weights = [np.full((2 * s + 1,), 1.0 / (2 * s + 1), np.float32)
                           for s in upsample_scales]

    x = sum(jnp.einsum('od,bdt->bot', w_in[j], m[:, :, j:j + t_res])
            for j in range(k))

    def bn(x, g, b):
        mean = x.mean(axis=(0, 2), keepdims=True)
        var = ((x - mean) ** 2).mean(axis=(0, 2), keepdims=True)
        return (x - mean) * jax.lax.rsqrt(var + EPS) * g[None] + b[None]

    x = jax.nn.relu(bn(x, g0, b0))
    for i in range(w1s.shape[0]):
        h = jnp.einsum('oc,bct->bot', w1s[i], x)
        h = jax.nn.relu(bn(h, g1s[i], b1s[i]))
        h = jnp.einsum('oc,bct->bot', w2s[i], h)
        h = bn(h, g2s[i], b2s[i])
        x = x + h
    aux = jnp.einsum('rc,bct->brt', w_out, x) + b_out[None]
    aux = jnp.repeat(aux, total, axis=-1)

    y = m
    for s, w in zip(upsample_scales, up_conv_weights):
        y = jnp.repeat(y, s, axis=-1)
        wid = y.shape[-1]
        yp = jnp.pad(y, ((0, 0), (0, 0), (s, s)))
        y = sum(float(w[j]) * yp[:, :, j:j + wid] for j in range(2 * s + 1))
    if indent > 0:
        y = y[:, :, indent:y.shape[-1] - indent]
    return jnp.transpose(y, (0, 2, 1)), jnp.transpose(aux, (0, 2, 1))


# ----------------------------------------------------------------------------
if __name__ == "__main__":
    # UpsampleNetwork(feat_dims=16, upsample_scales=(2,2), compute_dims=32,
    #                 res_blocks=2, res_out_dims=16, pad=2)
    # T=134 is chosen so the kernel-2 grid exercises both the nt==1 path (aux vs.
    # conditioning), the nt>1 time-padded path with 128-aligned tiles, and the
    # padded-column correction in kernel 1, while all arrays stay tiny (<100 KB).
    B = 2
    feat_dims = 16
    T = 134
    pad = 2
    upsample_scales = (2, 2)
    compute_dims = 32
    res_blocks = 2
    res_out_dims = 16
    k = 2 * pad + 1

    key = jax.random.PRNGKey(0)
    ks = jax.random.split(key, 12)

    def rnorm(kk, shape, s=0.1):
        return jax.random.normal(kk, shape, jnp.float32) * s

    m = jax.random.normal(ks[0], (B, feat_dims, T), jnp.float32)

    # conv weights stored as (k, out, in); BN/bias params stored as (C, 1)
    w_in = rnorm(ks[1], (k, compute_dims, feat_dims))
    g0 = 1.0 + rnorm(ks[2], (compute_dims, 1))
    b0 = rnorm(ks[3], (compute_dims, 1))
    w1s = rnorm(ks[4], (res_blocks, compute_dims, compute_dims))
    g1s = 1.0 + rnorm(ks[5], (res_blocks, compute_dims, 1))
    b1s = rnorm(ks[6], (res_blocks, compute_dims, 1))
    w2s = rnorm(ks[7], (res_blocks, compute_dims, compute_dims))
    g2s = 1.0 + rnorm(ks[8], (res_blocks, compute_dims, 1))
    b2s = rnorm(ks[9], (res_blocks, compute_dims, 1))
    w_out = rnorm(ks[10], (res_out_dims, compute_dims))
    b_out = rnorm(ks[11], (res_out_dims, 1))
    params = (w_in, g0, b0, w1s, g1s, b1s, w2s, g2s, b2s, w_out, b_out)

    # rows_block=8 exercises a real multi-block (parallel) row grid at these sizes.
    out_m, out_aux = upsample_network_forward(m, params, upsample_scales, pad,
                                              rows_block=8)
    out_m, out_aux = jax.block_until_ready((out_m, out_aux))

    total = int(np.prod(upsample_scales))
    assert out_m.shape == (B, (T - 2 * pad) * total, feat_dims)
    assert out_aux.shape == (B, (T - 2 * pad) * total, res_out_dims)

    ref_m, ref_aux = upsample_network_ref(m, params, upsample_scales, pad)
    # All MXU ops now run at default (bf16-input / f32-accumulate) precision per the
    # performance review, so the conditioning-path check is relaxed from 1e-3 to
    # 3e-2 and the aux path stays at 5e-2 (covers bf16 rounding over 2 stages).
    np.testing.assert_allclose(np.asarray(out_m), np.asarray(ref_m),
                               rtol=3e-2, atol=3e-2)
    np.testing.assert_allclose(np.asarray(out_aux), np.asarray(ref_aux),
                               rtol=5e-2, atol=5e-2)

    print("KERNEL_OK")
</pallas_src>

<mosaic_0001>
module attributes {stable_mosaic.version = 11 : i64} {
  func.func @melresnet_kernel(%arg0: memref<80x384xf32, #tpu.memory_space<vmem>>, %arg1: memref<32x80xf32, #tpu.memory_space<vmem>>, %arg2: memref<32x1xf32, #tpu.memory_space<vmem>>, %arg3: memref<32x1xf32, #tpu.memory_space<vmem>>, %arg4: memref<2x32x32xf32, #tpu.memory_space<vmem>>, %arg5: memref<2x32x1xf32, #tpu.memory_space<vmem>>, %arg6: memref<2x32x1xf32, #tpu.memory_space<vmem>>, %arg7: memref<2x32x32xf32, #tpu.memory_space<vmem>>, %arg8: memref<2x32x1xf32, #tpu.memory_space<vmem>>, %arg9: memref<2x32x1xf32, #tpu.memory_space<vmem>>, %arg10: memref<16x32xf32, #tpu.memory_space<vmem>>, %arg11: memref<16x1xf32, #tpu.memory_space<vmem>>, %arg12: memref<16x384xf32, #tpu.memory_space<vmem>>) attributes {dimension_semantics = [], scalar_prefetch = 0 : i64, scratch_operands = 0 : i64, tpu.core_type = #tpu.core_type<tc>} {
    %c0 = arith.constant 0 : index
    %c0_0 = arith.constant 0 : index
    %0 = vector.load %arg1[%c0, %c0_0] : memref<32x80xf32, #tpu.memory_space<vmem>>, vector<32x80xf32>
    %c0_1 = arith.constant 0 : index
    %c0_2 = arith.constant 0 : index
    %1 = vector.load %arg0[%c0_1, %c0_2] : memref<80x384xf32, #tpu.memory_space<vmem>>, vector<80x384xf32>
    %cst = arith.constant dense<0.000000e+00> : vector<32x384xf32>
    %2 = tpu.matmul %0, %1, %cst {dimension_numbers = #tpu.dot_dimension_numbers<[1], [0], [0], [1], [0, 0, 1, 1], [], []>} : vector<32x80xf32>, vector<80x384xf32>, vector<32x384xf32> -> vector<32x384xf32>
    %cst_3 = arith.constant 0.000000e+00 : f32
    %3 = vector.broadcast %cst_3 : f32 to vector<32x1xf32>
    %c0_4 = arith.constant 0 : index
    %c0_5 = arith.constant 0 : index
    %4 = vector.load %arg2[%c0_4, %c0_5] : memref<32x1xf32, #tpu.memory_space<vmem>>, vector<32x1xf32>
    %c0_6 = arith.constant 0 : index
    %c0_7 = arith.constant 0 : index
    %5 = vector.load %arg3[%c0_6, %c0_7] : memref<32x1xf32, #tpu.memory_space<vmem>>, vector<32x1xf32>
    %cst_8 = arith.constant dense<0.000000e+00> : vector<32xf32>
    %6 = vector.multi_reduction <add>, %2, %cst_8 [1] : vector<32x384xf32> to vector<32xf32>
    %7 = vector.shape_cast %6 : vector<32xf32> to vector<32x1xf32>
    %cst_9 = arith.constant 1.240000e+02 : f32
    %8 = vector.broadcast %cst_9 : f32 to vector<32x1xf32>
    %9 = arith.mulf %8, %3 : vector<32x1xf32>
    %10 = arith.subf %7, %9 : vector<32x1xf32>
    %11 = arith.mulf %2, %2 : vector<32x384xf32>
    %cst_10 = arith.constant dense<0.000000e+00> : vector<32xf32>
    %12 = vector.multi_reduction <add>, %11, %cst_10 [1] : vector<32x384xf32> to vector<32xf32>
    %13 = vector.shape_cast %12 : vector<32xf32> to vector<32x1xf32>
    %14 = arith.mulf %3, %3 : vector<32x1xf32>
    %cst_11 = arith.constant 1.240000e+02 : f32
    %15 = vector.broadcast %cst_11 : f32 to vector<32x1xf32>
    %16 = arith.mulf %15, %14 : vector<32x1xf32>
    %17 = arith.subf %13, %16 : vector<32x1xf32>
    %cst_12 = arith.constant 0.00384615385 : f32
    %18 = vector.broadcast %cst_12 : f32 to vector<32x1xf32>
    %19 = arith.mulf %10, %18 : vector<32x1xf32>
    %cst_13 = arith.constant 0.00384615385 : f32
    %20 = vector.broadcast %cst_13 : f32 to vector<32x1xf32>
    %21 = arith.mulf %17, %20 : vector<32x1xf32>
    %22 = arith.mulf %19, %19 : vector<32x1xf32>
    %23 = arith.subf %21, %22 : vector<32x1xf32>
    %cst_14 = arith.constant 9.99999974E-6 : f32
    %24 = vector.broadcast %cst_14 : f32 to vector<32x1xf32>
    %25 = arith.addf %23, %24 : vector<32x1xf32>
    %26 = math.rsqrt %25 : vector<32x1xf32>
    %27 = arith.mulf %4, %26 : vector<32x1xf32>
    %28 = arith.mulf %19, %27 : vector<32x1xf32>
    %29 = arith.subf %5, %28 : vector<32x1xf32>
    %30 = vector.broadcast %27 : vector<32x1xf32> to vector<32x384xf32>
    %31 = arith.mulf %2, %30 : vector<32x384xf32>
    %32 = vector.broadcast %29 : vector<32x1xf32> to vector<32x384xf32>
    %33 = arith.addf %31, %32 : vector<32x384xf32>
    %34 = arith.mulf %3, %27 : vector<32x1xf32>
    %35 = arith.addf %34, %29 : vector<32x1xf32>
    %cst_15 = arith.constant 0.000000e+00 : f32
    %36 = vector.broadcast %cst_15 : f32 to vector<32x384xf32>
    %37 = arith.maximumf %33, %36 : vector<32x384xf32>
    %cst_16 = arith.constant 0.000000e+00 : f32
    %38 = vector.broadcast %cst_16 : f32 to vector<32x1xf32>
    %39 = arith.maximumf %35, %38 : vector<32x1xf32>
    %c0_i32 = arith.constant 0 : i32
    %c2_i32 = arith.constant 2 : i32
    %40 = arith.addi %c0_i32, %c2_i32 : i32
    %c1_i32 = arith.constant 1 : i32
    %41:2 = scf.for %arg13 = %c0_i32 to %40 step %c1_i32 iter_args(%arg14 = %37, %arg15 = %39) -> (vector<32x384xf32>, vector<32x1xf32>)  : i32 {
      %48 = arith.index_cast %arg13 : i32 to index
      %c0_25 = arith.constant 0 : index
      %c0_26 = arith.constant 0 : index
      %49 = vector.load %arg4[%48, %c0_25, %c0_26] : memref<2x32x32xf32, #tpu.memory_space<vmem>>, vector<1x32x32xf32>
      %50 = vector.shape_cast %49 : vector<1x32x32xf32> to vector<32x32xf32>
      %cst_27 = arith.constant dense<0.000000e+00> : vector<32x384xf32>
      %51 = tpu.matmul %50, %arg14, %cst_27 {dimension_numbers = #tpu.dot_dimension_numbers<[1], [0], [0], [1], [0, 0, 1, 1], [], []>} : vector<32x32xf32>, vector<32x384xf32>, vector<32x384xf32> -> vector<32x384xf32>
      %52 = arith.index_cast %arg13 : i32 to index
      %c0_28 = arith.constant 0 : index
      %c0_29 = arith.constant 0 : index
      %53 = vector.load %arg4[%52, %c0_28, %c0_29] : memref<2x32x32xf32, #tpu.memory_space<vmem>>, vector<1x32x32xf32>
      %54 = vector.shape_cast %53 : vector<1x32x32xf32> to vector<32x32xf32>
      %cst_30 = arith.constant dense<0.000000e+00> : vector<32x1xf32>
      %55 = tpu.matmul %54, %arg15, %cst_30 {dimension_numbers = #tpu.dot_dimension_numbers<[1], [0], [0], [1], [0, 0, 1, 1], [], []>} : vector<32x32xf32>, vector<32x1xf32>, vector<32x1xf32> -> vector<32x1xf32>
      %56 = arith.index_cast %arg13 : i32 to index
      %c0_31 = arith.constant 0 : index
      %c0_32 = arith.constant 0 : index
      %57 = vector.load %arg5[%56, %c0_31, %c0_32] : memref<2x32x1xf32, #tpu.memory_space<vmem>>, vector<1x32x1xf32>
      %58 = vector.shape_cast %57 : vector<1x32x1xf32> to vector<32x1xf32>
      %59 = arith.index_cast %arg13 : i32 to index
      %c0_33 = arith.constant 0 : index
      %c0_34 = arith.constant 0 : index
      %60 = vector.load %arg6[%59, %c0_33, %c0_34] : memref<2x32x1xf32, #tpu.memory_space<vmem>>, vector<1x32x1xf32>
      %61 = vector.shape_cast %60 : vector<1x32x1xf32> to vector<32x1xf32>
      %cst_35 = arith.constant dense<0.000000e+00> : vector<32xf32>
      %62 = vector.multi_reduction <add>, %51, %cst_35 [1] : vector<32x384xf32> to vector<32xf32>
      %63 = vector.shape_cast %62 : vector<32xf32> to vector<32x1xf32>
      %cst_36 = arith.constant 1.240000e+02 : f32
      %64 = vector.broadcast %cst_36 : f32 to vector<32x1xf32>
      %65 = arith.mulf %64, %55 : vector<32x1xf32>
      %66 = arith.subf %63, %65 : vector<32x1xf32>
      %67 = arith.mulf %51, %51 : vector<32x384xf32>
      %cst_37 = arith.constant dense<0.000000e+00> : vector<32xf32>
      %68 = vector.multi_reduction <add>, %67, %cst_37 [1] : vector<32x384xf32> to vector<32xf32>
      %69 = vector.shape_cast %68 : vector<32xf32> to vector<32x1xf32>
      %70 = arith.mulf %55, %55 : vector<32x1xf32>
      %cst_38 = arith.constant 1.240000e+02 : f32
      %71 = vector.broadcast %cst_38 : f32 to vector<32x1xf32>
      %72 = arith.mulf %71, %70 : vector<32x1xf32>
      %73 = arith.subf %69, %72 : vector<32x1xf32>
      %cst_39 = arith.constant 0.00384615385 : f32
      %74 = vector.broadcast %cst_39 : f32 to vector<32x1xf32>
      %75 = arith.mulf %66, %74 : vector<32x1xf32>
      %cst_40 = arith.constant 0.00384615385 : f32
      %76 = vector.broadcast %cst_40 : f32 to vector<32x1xf32>
      %77 = arith.mulf %73, %76 : vector<32x1xf32>
      %78 = arith.mulf %75, %75 : vector<32x1xf32>
      %79 = arith.subf %77, %78 : vector<32x1xf32>
      %cst_41 = arith.constant 9.99999974E-6 : f32
      %80 = vector.broadcast %cst_41 : f32 to vector<32x1xf32>
      %81 = arith.addf %79, %80 : vector<32x1xf32>
      %82 = math.rsqrt %81 : vector<32x1xf32>
      %83 = arith.mulf %58, %82 : vector<32x1xf32>
      %84 = arith.mulf %75, %83 : vector<32x1xf32>
      %85 = arith.subf %61, %84 : vector<32x1xf32>
      %86 = vector.broadcast %83 : vector<32x1xf32> to vector<32x384xf32>
      %87 = arith.mulf %51, %86 : vector<32x384xf32>
      %88 = vector.broadcast %85 : vector<32x1xf32> to vector<32x384xf32>
      %89 = arith.addf %87, %88 : vector<32x384xf32>
      %90 = arith.mulf %55, %83 : vector<32x1xf32>
      %91 = arith.addf %90, %85 : vector<32x1xf32>
      %cst_42 = arith.constant 0.000000e+00 : f32
      %92 = vector.broadcast %cst_42 : f32 to vector<32x384xf32>
      %93 = arith.maximumf %89, %92 : vector<32x384xf32>
      %cst_43 = arith.constant 0.000000e+00 : f32
      %94 = vector.broadcast %cst_43 : f32 to vector<32x1xf32>
      %95 = arith.maximumf %91, %94 : vector<32x1xf32>
      %96 = arith.index_cast %arg13 : i32 to index
      %c0_44 = arith.constant 0 : index
      %c0_45 = arith.constant 0 : index
      %97 = vector.load %arg7[%96, %c0_44, %c0_45] : memref<2x32x32xf32, #tpu.memory_space<vmem>>, vector<1x32x32xf32>
      %98 = vector.shape_cast %97 : vector<1x32x32xf32> to vector<32x32xf32>
      %cst_46 = arith.constant dense<0.000000e+00> : vector<32x384xf32>
      %99 = tpu.matmul %98, %93, %cst_46 {dimension_numbers = #tpu.dot_dimension_numbers<[1], [0], [0], [1], [0, 0, 1, 1], [], []>} : vector<32x32xf32>, vector<32x384xf32>, vector<32x384xf32> -> vector<32x384xf32>
      %100 = arith.index_cast %arg13 : i32 to index
      %c0_47 = arith.constant 0 : index
      %c0_48 = arith.constant 0 : index
      %101 = vector.load %arg7[%100, %c0_47, %c0_48] : memref<2x32x32xf32, #tpu.memory_space<vmem>>, vector<1x32x32xf32>
      %102 = vector.shape_cast %101 : vector<1x32x32xf32> to vector<32x32xf32>
      %cst_49 = arith.constant dense<0.000000e+00> : vector<32x1xf32>
      %103 = tpu.matmul %102, %95, %cst_49 {dimension_numbers = #tpu.dot_dimension_numbers<[1], [0], [0], [1], [0, 0, 1, 1], [], []>} : vector<32x32xf32>, vector<32x1xf32>, vector<32x1xf32> -> vector<32x1xf32>
      %104 = arith.index_cast %arg13 : i32 to index
      %c0_50 = arith.constant 0 : index
      %c0_51 = arith.constant 0 : index
      %105 = vector.load %arg8[%104, %c0_50, %c0_51] : memref<2x32x1xf32, #tpu.memory_space<vmem>>, vector<1x32x1xf32>
      %106 = vector.shape_cast %105 : vector<1x32x1xf32> to vector<32x1xf32>
      %107 = arith.index_cast %arg13 : i32 to index
      %c0_52 = arith.constant 0 : index
      %c0_53 = arith.constant 0 : index
      %108 = vector.load %arg9[%107, %c0_52, %c0_53] : memref<2x32x1xf32, #tpu.memory_space<vmem>>, vector<1x32x1xf32>
      %109 = vector.shape_cast %108 : vector<1x32x1xf32> to vector<32x1xf32>
      %cst_54 = arith.constant dense<0.000000e+00> : vector<32xf32>
      %110 = vector.multi_reduction <add>, %99, %cst_54 [1] : vector<32x384xf32> to vector<32xf32>
      %111 = vector.shape_cast %110 : vector<32xf32> to vector<32x1xf32>
      %cst_55 = arith.constant 1.240000e+02 : f32
      %112 = vector.broadcast %cst_55 : f32 to vector<32x1xf32>
      %113 = arith.mulf %112, %103 : vector<32x1xf32>
      %114 = arith.subf %111, %113 : vector<32x1xf32>
      %115 = arith.mulf %99, %99 : vector<32x384xf32>
      %cst_56 = arith.constant dense<0.000000e+00> : vector<32xf32>
      %116 = vector.multi_reduction <add>, %115, %cst_56 [1] : vector<32x384xf32> to vector<32xf32>
      %117 = vector.shape_cast %116 : vector<32xf32> to vector<32x1xf32>
      %118 = arith.mulf %103, %103 : vector<32x1xf32>
      %cst_57 = arith.constant 1.240000e+02 : f32
      %119 = vector.broadcast %cst_57 : f32 to vector<32x1xf32>
      %120 = arith.mulf %119, %118 : vector<32x1xf32>
      %121 = arith.subf %117, %120 : vector<32x1xf32>
      %cst_58 = arith.constant 0.00384615385 : f32
      %122 = vector.broadcast %cst_58 : f32 to vector<32x1xf32>
      %123 = arith.mulf %114, %122 : vector<32x1xf32>
      %cst_59 = arith.constant 0.00384615385 : f32
      %124 = vector.broadcast %cst_59 : f32 to vector<32x1xf32>
      %125 = arith.mulf %121, %124 : vector<32x1xf32>
      %126 = arith.mulf %123, %123 : vector<32x1xf32>
      %127 = arith.subf %125, %126 : vector<32x1xf32>
      %cst_60 = arith.constant 9.99999974E-6 : f32
      %128 = vector.broadcast %cst_60 : f32 to vector<32x1xf32>
      %129 = arith.addf %127, %128 : vector<32x1xf32>
      %130 = math.rsqrt %129 : vector<32x1xf32>
      %131 = arith.mulf %106, %130 : vector<32x1xf32>
      %132 = arith.mulf %123, %131 : vector<32x1xf32>
      %133 = arith.subf %109, %132 : vector<32x1xf32>
      %134 = vector.broadcast %131 : vector<32x1xf32> to vector<32x384xf32>
      %135 = arith.mulf %99, %134 : vector<32x384xf32>
      %136 = vector.broadcast %133 : vector<32x1xf32> to vector<32x384xf32>
      %137 = arith.addf %135, %136 : vector<32x384xf32>
      %138 = arith.mulf %103, %131 : vector<32x1xf32>
      %139 = arith.addf %138, %133 : vector<32x1xf32>
      %140 = arith.addf %arg14, %137 : vector<32x384xf32>
      %141 = arith.addf %arg15, %139 : vector<32x1xf32>
      scf.yield %140, %141 : vector<32x384xf32>, vector<32x1xf32>
    }
    %c2_i32_17 = arith.constant 2 : i32
    %c0_18 = arith.constant 0 : index
    %c0_19 = arith.constant 0 : index
    %42 = vector.load %arg10[%c0_18, %c0_19] : memref<16x32xf32, #tpu.memory_space<vmem>>, vector<16x32xf32>
    %cst_20 = arith.constant dense<0.000000e+00> : vector<16x384xf32>
    %43 = tpu.matmul %42, %41#0, %cst_20 {dimension_numbers = #tpu.dot_dimension_numbers<[1], [0], [0], [1], [0, 0, 1, 1], [], []>} : vector<16x32xf32>, vector<32x384xf32>, vector<16x384xf32> -> vector<16x384xf32>
    %c0_21 = arith.constant 0 : index
    %c0_22 = arith.constant 0 : index
    %44 = vector.load %arg11[%c0_21, %c0_22] : memref<16x1xf32, #tpu.memory_space<vmem>>, vector<16x1xf32>
    %45 = vector.broadcast %44 : vector<16x1xf32> to vector<16x384xf32>
    %46 = arith.addf %43, %45 : vector<16x384xf32>
    %c0_23 = arith.constant 0 : index
    %c0_24 = arith.constant 0 : index
    %47 = vector.load %arg12[%c0_23, %c0_24] : memref<16x384xf32, #tpu.memory_space<vmem>>, vector<16x384xf32>
    tpu.vector_store %arg12[%c0_23, %c0_24], %46 {strides = array<i32>} : memref<16x384xf32, #tpu.memory_space<vmem>>, vector<16x384xf32>,
    return
  }
}

</mosaic_0001>

<llo_original>
// kernel: tpu_custom_call.1
$region0: #{tpu_custom_call.1}
  #allocation0 [shape = 'u32[]', space=smem, size = 0x4, offset = 0x4, fixed_abs, tag = 'smem constant byte address 0x4 - core index']
  #allocation1 [shape = 'u32[144,128]{1,0:T(1,128)}', space=vmem, size = 0x12000, scoped, tag = 'internal scratch']
  %s0 = inlined_call_operand.vmem [shape: f32[80,384], index: 0, kind: input, shape index: {}]
  %s1 = inlined_call_operand.vmem [shape: f32[32,80], index: 1, kind: input, shape index: {}]
  %s2 = inlined_call_operand.vmem [shape: f32[32,1], index: 2, kind: input, shape index: {}]
  %s3 = inlined_call_operand.vmem [shape: f32[32,1], index: 3, kind: input, shape index: {}]
  %s4 = inlined_call_operand.vmem [shape: f32[2,32,32], index: 4, kind: input, shape index: {}]
  %s5 = inlined_call_operand.vmem [shape: f32[2,32,1], index: 5, kind: input, shape index: {}]
  %s6 = inlined_call_operand.vmem [shape: f32[2,32,1], index: 6, kind: input, shape index: {}]
  %s7 = inlined_call_operand.hbm [shape: f32[2,32,32], index: 7, kind: input, shape index: {}]
  %s8 = inlined_call_operand.vmem [shape: f32[2,32,1], index: 8, kind: input, shape index: {}]
  %s9 = inlined_call_operand.vmem [shape: f32[2,32,1], index: 9, kind: input, shape index: {}]
  %s10 = inlined_call_operand.vmem [shape: f32[16,32], index: 10, kind: input, shape index: {}]
  %s11 = inlined_call_operand.vmem [shape: f32[16,1], index: 11, kind: input, shape index: {}]
  %s12 = inlined_call_operand.hbm [shape: f32[16,384], index: 12, kind: output, shape index: {}]
  %s13 = sld [smem:[#allocation0]]
  $region69: #{tpu_custom_call.1} parent=0
    _
  %s15 = ssub.s32 1, %s13
  %s16 = scalar_select 0, %s15, %s13
  $region1: #{tpu_custom_call.1} parent=0
    #allocation2 [shape = 'u8[32768]{0}', space=vmem, size = 0x8000, scoped, tag = 'input window, operand 7, single buffered']
    #allocation3 [shape = 's32[1]{0}', space=sflag, size = 0x4, scoped, tag = 'scoped memory for tpu_custom_call.1']
    #allocation4 [shape = 's32[1]{0}', space=sflag, size = 0x4, scoped, tag = 'scoped memory for tpu_custom_call.1']
    #allocation5 [shape = 'u8[24576]{0}', space=vmem, size = 0x6000, scoped, tag = 'output window, operand 0, single buffered']
    %17 = vsyncpa [#allocation3], 0
    %18 = vsyncpa [#allocation4], 0
    // Predicated region
    $region2: #{tpu_custom_call.1} parent=1 // pred_check
      _
    $region3: #{tpu_custom_call.1} parent=1 // pred_check_branch
      %20 = sbr.rel (0) target = $region5
    $region4: #{tpu_custom_call.1} parent=1 // pred_region
      _
    $region5: #{tpu_custom_call.1} parent=1 // pred_fallthru
      _
    // Predicated region
    $region6: #{tpu_custom_call.1} parent=1 // pred_check
      _
    $region7: #{tpu_custom_call.1} parent=1 // pred_check_branch
      %22 = sbr.rel (0) target = $region9
    $region8: #{tpu_custom_call.1} parent=1 // pred_region
      _
    $region9: #{tpu_custom_call.1} parent=1 // pred_fallthru
      _
    // Predicated region
    $region10: #{tpu_custom_call.1} parent=1 // pred_check
      _
    $region11: #{tpu_custom_call.1} parent=1 // pred_check_branch
      %24 = sbr.rel (0) target = $region13
    $region12: #{tpu_custom_call.1} parent=1 // pred_region
      _
    $region13: #{tpu_custom_call.1} parent=1 // pred_fallthru
      _
    // Predicated region
    $region14: #{tpu_custom_call.1} parent=1 // pred_check
      _
    $region15: #{tpu_custom_call.1} parent=1 // pred_check_branch
      %26 = sbr.rel (0) target = $region17
    $region16: #{tpu_custom_call.1} parent=1 // pred_region
      _
    $region17: #{tpu_custom_call.1} parent=1 // pred_fallthru
      _
    // Predicated region
    $region18: #{tpu_custom_call.1} parent=1 // pred_check
      _
    $region19: #{tpu_custom_call.1} parent=1 // pred_check_branch
      %28 = sbr.rel (0) target = $region21
    $region20: #{tpu_custom_call.1} parent=1 // pred_region
      _
    $region21: #{tpu_custom_call.1} parent=1 // pred_fallthru
      _
    // Predicated region
    $region22: #{tpu_custom_call.1} parent=1 // pred_check
      _
    $region23: #{tpu_custom_call.1} parent=1 // pred_check_branch
      %30 = sbr.rel (0) target = $region25
    $region24: #{tpu_custom_call.1} parent=1 // pred_region
      _
    $region25: #{tpu_custom_call.1} parent=1 // pred_fallthru
      _
    // Predicated region
    $region26: #{tpu_custom_call.1} parent=1 // pred_check
      _
    $region27: #{tpu_custom_call.1} parent=1 // pred_check_branch
      %32 = sbr.rel (0) target = $region29
    $region28: #{tpu_custom_call.1} parent=1 // pred_region
      _
    $region29: #{tpu_custom_call.1} parent=1 // pred_fallthru
      _
    // Predicated region
    $region30: #{tpu_custom_call.1} parent=1 // pred_check
      _
    $region31: #{tpu_custom_call.1} parent=1 // pred_check_branch
      %34 = sbr.rel (0) target = $region33
    $region32: #{tpu_custom_call.1} parent=1 // pred_region
      %s36 = ssub.s32 1024, 1024
      %37 = vsyncadd [#allocation3], %s36
      %s38 = sshll.u32 [#allocation2], 4
      %s39 = int_to_ptr.vmem [resolvable:$true] %s38
      %44 = dma.hbm_to_vmem [thread:$0]  %s7, 1024, %s39, [#allocation3], 128, 128, 8
    $region33: #{tpu_custom_call.1} parent=1 // pred_fallthru
      _
    // Predicated region
    $region34: #{tpu_custom_call.1} parent=1 // pred_check
      _
    $region35: #{tpu_custom_call.1} parent=1 // pred_check_branch
      %46 = sbr.rel (0) target = $region37
    $region36: #{tpu_custom_call.1} parent=1 // pred_region
      _
    $region37: #{tpu_custom_call.1} parent=1 // pred_fallthru
      _
    // Predicated region
    $region38: #{tpu_custom_call.1} parent=1 // pred_check
      _
    $region39: #{tpu_custom_call.1} parent=1 // pred_check_branch
      %48 = sbr.rel (0) target = $region41
    $region40: #{tpu_custom_call.1} parent=1 // pred_region
      _
    $region41: #{tpu_custom_call.1} parent=1 // pred_fallthru
      _
    // Predicated region
    $region42: #{tpu_custom_call.1} parent=1 // pred_check
      _
    $region43: #{tpu_custom_call.1} parent=1 // pred_check_branch
      %50 = sbr.rel (0) target = $region45
    $region44: #{tpu_custom_call.1} parent=1 // pred_region
      _
    $region45: #{tpu_custom_call.1} parent=1 // pred_fallthru
      _
    // Predicated region
    $region46: #{tpu_custom_call.1} parent=1 // pred_check
      _
    $region47: #{tpu_custom_call.1} parent=1 // pred_check_branch
      %52 = sbr.rel (0) target = $region49
    $region48: #{tpu_custom_call.1} parent=1 // pred_region
      _
    $region49: #{tpu_custom_call.1} parent=1 // pred_fallthru
      _
    // Predicated region
    $region50: #{tpu_custom_call.1} parent=1 // pred_check
      _
    $region51: #{tpu_custom_call.1} parent=1 // pred_check_branch
      %54 = sbr.rel (0) target = $region53
    $region52: #{tpu_custom_call.1} parent=1 // pred_region
      %55 = dma.done [#allocation3], 1024
    $region53: #{tpu_custom_call.1} parent=1 // pred_fallthru
      _
    %v56 = vld [vmem:[%s1] sm:$0xff]
    %v57 = vld [vmem:[%s1 + $0x8] sm:$0xff]
    %v58 = vld [vmem:[%s1 + $0x10] sm:$0xff]
    %v59 = vld [vmem:[%s1 + $0x18] sm:$0xff]
    %v60 = vld [vmem:[%s0] sm:$0xff]
    %v61 = vld [vmem:[%s0 + $0x8] sm:$0xff]
    %v62 = vld [vmem:[%s0 + $0x10] sm:$0xff]
    %v63 = vld [vmem:[%s0 + $0x18] sm:$0xff]
    %v64 = vld [vmem:[%s0 + $0x20] sm:$0xff]
    %v65 = vld [vmem:[%s0 + $0x28] sm:$0xff]
    %v66 = vld [vmem:[%s0 + $0x30] sm:$0xff]
    %v67 = vld [vmem:[%s0 + $0x38] sm:$0xff]
    %v68 = vld [vmem:[%s0 + $0x40] sm:$0xff]
    %v69 = vld [vmem:[%s0 + $0x48] sm:$0xff]
    %v70 = vld [vmem:[%s0 + $0x50] sm:$0xff]
    %v71 = vld [vmem:[%s0 + $0x58] sm:$0xff]
    %v72 = vld [vmem:[%s0 + $0x60] sm:$0xff]
    %v73 = vld [vmem:[%s0 + $0x68] sm:$0xff]
    %v74 = vld [vmem:[%s0 + $0x70] sm:$0xff]
    %v75 = vld [vmem:[%s0 + $0x78] sm:$0xff]
    %v76 = vld [vmem:[%s0 + $0x80] sm:$0xff]
    %v77 = vld [vmem:[%s0 + $0x88] sm:$0xff]
    %v78 = vld [vmem:[%s0 + $0x90] sm:$0xff]
    %v79 = vld [vmem:[%s0 + $0x98] sm:$0xff]
    %v80 = vld [vmem:[%s0 + $0xa0] sm:$0xff]
    %v81 = vld [vmem:[%s0 + $0xa8] sm:$0xff]
    %v82 = vld [vmem:[%s0 + $0xb0] sm:$0xff]
    %v83 = vld [vmem:[%s0 + $0xb8] sm:$0xff]
    %v84 = vld [vmem:[%s0 + $0xc0] sm:$0xff]
    %v85 = vld [vmem:[%s0 + $0xc8] sm:$0xff]
    %v86 = vld [vmem:[%s0 + $0xd0] sm:$0xff]
    %v87 = vld [vmem:[%s0 + $0xd8] sm:$0xff]
    %v88 = vld [vmem:[%s0 + $0xe0] sm:$0xff]
    %v89 = vld [vmem:[%s0 + $0xe8] sm:$0xff]
    %vm90 = vcmask 654336
    %v92 = vsel %vm90, %v56, 0
    %v95 = vsel %vm90, %v57, 0
    %v98 = vsel %vm90, %v58, 0
    %v101 = vsel %vm90, %v59, 0
    %103 = vmatprep.subr.mxu0 0.0
    %104 = vmatpush1.msra.mxu0 0.0
    %105 = vmatprep.subr.mxu0 0.0
    %106 = vmatpush1.msra.mxu0 0.0
    %107 = vmatprep.subr.mxu0 0.0
    %108 = vmatpush1.msra.mxu0 0.0
    %109 = vmatprep.subr.mxu0 0.0
    %110 = vmatpush1.msra.mxu0 0.0
    %111 = vmatprep.subr.mxu0 0.0
    %112 = vmatpush1.msra.mxu0 0.0
    %113 = vmatprep.subr.mxu0 0.0
    %114 = vmatpush1.msra.mxu0 0.0
    %115 = vmatprep.subr.mxu0 %v88
    %116 = vmatpush1.msra.mxu0 %v87
    %117 = vmatprep.subr.mxu0 %v85
    %118 = vmatpush1.msra.mxu0 %v84
    %119 = vmatprep.subr.mxu0 %v82
    %120 = vmatpush1.msra.mxu0 %v81
    %121 = vmatprep.subr.mxu0 %v79
    %122 = vmatpush1.msra.mxu0 %v78
    %123 = vmatprep.subr.mxu0 %v76
    %124 = vmatpush1.msra.mxu0 %v75
    %125 = vmatprep.subr.mxu0 %v73
    %126 = vmatpush1.msra.mxu0 %v72
    %127 = vmatprep.subr.mxu0 %v70
    %128 = vmatpush1.msra.mxu0 %v69
    %129 = vmatprep.subr.mxu0 %v67
    %130 = vmatpush1.msra.mxu0 %v66
    %131 = vmatprep.subr.mxu0 %v64
    %132 = vmatpush1.msra.mxu0 %v63
    %133 = vmatprep.subr.mxu0 %v61
    %134 = vmatpush1.msra.mxu0 %v60
    %135 = vmatprep.subr.mxu0 0.0
    %136 = vmatpush2.msra.mxu0 0.0
    %137 = vmatprep.subr.mxu0 0.0
    %138 = vmatpush2.msra.mxu0 0.0
    %139 = vmatprep.subr.mxu0 0.0
    %140 = vmatpush2.msra.mxu0 0.0
    %141 = vmatprep.subr.mxu0 0.0
    %142 = vmatpush2.msra.mxu0 0.0
    %143 = vmatprep.subr.mxu0 0.0
    %144 = vmatpush2.msra.mxu0 0.0
    %145 = vmatprep.subr.mxu0 0.0
    %146 = vmatpush2.msra.mxu0 0.0
    %147 = vmatprep.subr.mxu0 0.0
    %148 = vmatpush2.msra.mxu0 0.0
    %149 = vmatprep.subr.mxu0 0.0
    %150 = vmatpush2.msra.mxu0 0.0
    %151 = vmatprep.subr.mxu0 0.0
    %152 = vmatpush2.msra.mxu0 0.0
    %153 = vmatprep.subr.mxu0 0.0
    %154 = vmatpush2.msra.mxu0 0.0
    %155 = vmatprep.subr.mxu0 0.0
    %156 = vmatpush2.msra.mxu0 0.0
    %157 = vmatprep.subr.mxu0 0.0
    %158 = vmatpush2.msra.mxu0 0.0
    %159 = vmatprep.subr.mxu0 0.0
    %160 = vmatpush2.msra.mxu0 0.0
    %161 = vmatprep.subr.mxu0 0.0
    %162 = vmatpush2.msra.mxu0 0.0
    %163 = vmatprep.subr.mxu0 0.0
    %164 = vmatpush2.msra.mxu0 0.0
    %165 = vmatprep.subr.mxu0 0.0
    %166 = vmatpush2.msra.mxu0 0.0
    %167 = vmatprep.mubr.f32.mxu0 0.0
    %168 = vmatmul.mubr.f32.gmra.mxu0 %v92
    %v169 = vpop.f32.mrf.mxu0
    %v170 = vadd.f32 0.0, %v169
    %v171 = vpop.f32.mrf.mxu0
    %v172 = vadd.f32 0.0, %v171
    %173 = vmatprep.mubr.f32.mxu0 0.0
    %174 = vmatmul.mubr.f32.gmra.mxu0 %v95
    %v175 = vpop.f32.mrf.mxu0
    %v176 = vadd.f32 0.0, %v175
    %v177 = vpop.f32.mrf.mxu0
    %v178 = vadd.f32 0.0, %v177
    %179 = vmatprep.mubr.f32.mxu0 0.0
    %180 = vmatmul.mubr.f32.gmra.mxu0 %v98
    %v181 = vpop.f32.mrf.mxu0
    %v182 = vadd.f32 0.0, %v181
    %v183 = vpop.f32.mrf.mxu0
    %v184 = vadd.f32 0.0, %v183
    %185 = vmatprep.mubr.f32.mxu0 0.0
    %186 = vmatmul.mubr.f32.gmra.mxu0 %v101
    %v187 = vpop.f32.mrf.mxu0
    %v188 = vadd.f32 0.0, %v187
    %v189 = vpop.f32.mrf.mxu0
    %v190 = vadd.f32 0.0, %v189
    %191 = vdwg.mxu0
    %192 = vmatprep.subr.mxu0 0.0
    %193 = vmatpush1.msra.mxu0 0.0
    %194 = vmatprep.subr.mxu0 0.0
    %195 = vmatpush1.msra.mxu0 0.0
    %196 = vmatprep.subr.mxu0 0.0
    %197 = vmatpush1.msra.mxu0 0.0
    %198 = vmatprep.subr.mxu0 0.0
    %199 = vmatpush1.msra.mxu0 0.0
    %200 = vmatprep.subr.mxu0 0.0
    %201 = vmatpush1.msra.mxu0 0.0
    %202 = vmatprep.subr.mxu0 0.0
    %203 = vmatpush1.msra.mxu0 0.0
    %204 = vmatprep.subr.mxu0 0.0
    %205 = vmatpush1.msra.mxu0 %v89
    %206 = vmatprep.subr.mxu0 0.0
    %207 = vmatpush1.msra.mxu0 %v86
    %208 = vmatprep.subr.mxu0 0.0
    %209 = vmatpush1.msra.mxu0 %v83
    %210 = vmatprep.subr.mxu0 0.0
    %211 = vmatpush1.msra.mxu0 %v80
    %212 = vmatprep.subr.mxu0 0.0
    %213 = vmatpush1.msra.mxu0 %v77
    %214 = vmatprep.subr.mxu0 0.0
    %215 = vmatpush1.msra.mxu0 %v74
    %216 = vmatprep.subr.mxu0 0.0
    %217 = vmatpush1.msra.mxu0 %v71
    %218 = vmatprep.subr.mxu0 0.0
    %219 = vmatpush1.msra.mxu0 %v68
    %220 = vmatprep.subr.mxu0 0.0
    %221 = vmatpush1.msra.mxu0 %v65
    %222 = vmatprep.subr.mxu0 0.0
    %223 = vmatpush1.msra.mxu0 %v62
    %224 = vmatprep.subr.mxu0 0.0
    %225 = vmatpush2.msra.mxu0 0.0
    %226 = vmatprep.subr.mxu0 0.0
    %227 = vmatpush2.msra.mxu0 0.0
    %228 = vmatprep.subr.mxu0 0.0
    %229 = vmatpush2.msra.mxu0 0.0
    %230 = vmatprep.subr.mxu0 0.0
    %231 = vmatpush2.msra.mxu0 0.0
    %232 = vmatprep.subr.mxu0 0.0
    %233 = vmatpush2.msra.mxu0 0.0
    %234 = vmatprep.subr.mxu0 0.0
    %235 = vmatpush2.msra.mxu0 0.0
    %236 = vmatprep.subr.mxu0 0.0
    %237 = vmatpush2.msra.mxu0 0.0
    %238 = vmatprep.subr.mxu0 0.0
    %239 = vmatpush2.msra.mxu0 0.0
    %240 = vmatprep.subr.mxu0 0.0
    %241 = vmatpush2.msra.mxu0 0.0
    %242 = vmatprep.subr.mxu0 0.0
    %243 = vmatpush2.msra.mxu0 0.0
    %244 = vmatprep.subr.mxu0 0.0
    %245 = vmatpush2.msra.mxu0 0.0
    %246 = vmatprep.subr.mxu0 0.0
    %247 = vmatpush2.msra.mxu0 0.0
    %248 = vmatprep.subr.mxu0 0.0
    %249 = vmatpush2.msra.mxu0 0.0
    %250 = vmatprep.subr.mxu0 0.0
    %251 = vmatpush2.msra.mxu0 0.0
    %252 = vmatprep.subr.mxu0 0.0
    %253 = vmatpush2.msra.mxu0 0.0
    %254 = vmatprep.subr.mxu0 0.0
    %255 = vmatpush2.msra.mxu0 0.0
    %256 = vmatprep.mubr.f32.mxu0 0.0
    %257 = vmatmul.mubr.f32.gmra.mxu0 %v92
    %v258 = vpop.f32.mrf.mxu0
    %v259 = vadd.f32 0.0, %v258
    %v260 = vpop.f32.mrf.mxu0
    %261 = vmatprep.mubr.f32.mxu0 0.0
    %262 = vmatmul.mubr.f32.gmra.mxu0 %v95
    %v263 = vpop.f32.mrf.mxu0
    %v264 = vadd.f32 0.0, %v263
    %v265 = vpop.f32.mrf.mxu0
    %266 = vmatprep.mubr.f32.mxu0 0.0
    %267 = vmatmul.mubr.f32.gmra.mxu0 %v98
    %v268 = vpop.f32.mrf.mxu0
    %v269 = vadd.f32 0.0, %v268
    %v270 = vpop.f32.mrf.mxu0
    %271 = vmatprep.mubr.f32.mxu0 0.0
    %272 = vmatmul.mubr.f32.gmra.mxu0 %v101
    %v273 = vpop.f32.mrf.mxu0
    %v274 = vadd.f32 0.0, %v273
    %v275 = vpop.f32.mrf.mxu0
    %276 = vdwg.mxu0
    %v277 = vld [vmem:[%s2] sm:$0xff]
    %v278 = vld [vmem:[%s2 + $0x8] sm:$0xff]
    %v279 = vld [vmem:[%s2 + $0x10] sm:$0xff]
    %v280 = vld [vmem:[%s2 + $0x18] sm:$0xff]
    %v281 = vld [vmem:[%s3] sm:$0xff]
    %v282 = vld [vmem:[%s3 + $0x8] sm:$0xff]
    %v283 = vld [vmem:[%s3 + $0x10] sm:$0xff]
    %v284 = vld [vmem:[%s3 + $0x18] sm:$0xff]
    %v285 = vadd.f32 %v170, %v172
    %v286 = vadd.f32 %v285, %v259
    %287 = vadd.xlane.f32.xlu0 %v286
    %v288 = vpop.xlane.xlu0 %287
    %v289 = vadd.f32 %v176, %v178
    %v290 = vadd.f32 %v289, %v264
    %291 = vadd.xlane.f32.xlu0 %v290
    %v292 = vpop.xlane.xlu0 %291
    %v293 = vadd.f32 %v182, %v184
    %v294 = vadd.f32 %v293, %v269
    %295 = vadd.xlane.f32.xlu0 %v294
    %v296 = vpop.xlane.xlu0 %295
    %v297 = vadd.f32 %v188, %v190
    %v298 = vadd.f32 %v297, %v274
    %299 = vadd.xlane.f32.xlu0 %v298
    %v300 = vpop.xlane.xlu0 %299
    %v301 = vmul.f32 %v170, %v170
    %v302 = vmul.f32 %v172, %v172
    %v303 = vmul.f32 %v259, %v259
    %v304 = vmul.f32 %v176, %v176
    %v305 = vmul.f32 %v178, %v178
    %v306 = vmul.f32 %v264, %v264
    %v307 = vmul.f32 %v182, %v182
    %v308 = vmul.f32 %v184, %v184
    %v309 = vmul.f32 %v269, %v269
    %v310 = vmul.f32 %v188, %v188
    %v311 = vmul.f32 %v190, %v190
    %v312 = vmul.f32 %v274, %v274
    %v313 = vadd.f32 %v301, %v302
    %v314 = vadd.f32 %v313, %v303
    %315 = vadd.xlane.f32.xlu0 %v314
    %v316 = vpop.xlane.xlu0 %315
    %v317 = vadd.f32 %v304, %v305
    %v318 = vadd.f32 %v317, %v306
    %319 = vadd.xlane.f32.xlu0 %v318
    %v320 = vpop.xlane.xlu0 %319
    %v321 = vadd.f32 %v307, %v308
    %v322 = vadd.f32 %v321, %v309
    %323 = vadd.xlane.f32.xlu0 %v322
    %v324 = vpop.xlane.xlu0 %323
    %v325 = vadd.f32 %v310, %v311
    %v326 = vadd.f32 %v325, %v312
    %327 = vadd.xlane.f32.xlu0 %v326
    %v328 = vpop.xlane.xlu0 %327
    %v329 = vmul.f32 %v288, 0.0038461538
    %v330 = vmul.f32 %v292, 0.0038461538
    %v331 = vmul.f32 %v296, 0.0038461538
    %v332 = vmul.f32 %v300, 0.0038461538
    %v333 = vmul.f32 %v316, 0.0038461538
    %v334 = vmul.f32 %v320, 0.0038461538
    %v335 = vmul.f32 %v324, 0.0038461538
    %v336 = vmul.f32 %v328, 0.0038461538
    %v337 = vmul.f32 %v329, %v329
    %v338 = vmul.f32 %v330, %v330
    %v339 = vmul.f32 %v331, %v331
    %v340 = vmul.f32 %v332, %v332
    %v341 = vsub.f32 %v333, %v337
    %v342 = vsub.f32 %v334, %v338
    %v343 = vsub.f32 %v335, %v339
    %v344 = vsub.f32 %v336, %v340
    %v345 = vadd.f32 %v341, 1e-05
    %v346 = vadd.f32 %v342, 1e-05
    %v347 = vadd.f32 %v343, 1e-05
    %v348 = vadd.f32 %v344, 1e-05
    %v349 = vrsqrt.pop %v345
    %v350 = vrsqrt.pop %v346
    %v351 = vrsqrt.pop %v347
    %v352 = vrsqrt.pop %v348
    %v353 = vmul.f32 %v277, %v349
    %v354 = vmul.f32 %v278, %v350
    %v355 = vmul.f32 %v279, %v351
    %v356 = vmul.f32 %v280, %v352
    %v357 = vmul.f32 %v329, %v353
    %v358 = vmul.f32 %v330, %v354
    %v359 = vmul.f32 %v331, %v355
    %v360 = vmul.f32 %v332, %v356
    %v361 = vsub.f32 %v281, %v357
    %v362 = vsub.f32 %v282, %v358
    %v363 = vsub.f32 %v283, %v359
    %v364 = vsub.f32 %v284, %v360
    %366 = vset.pattern.permute.xlu0 0
    %367 = vperm.xlu0 %366, %v353
    %v368 = vpop.permute.xlu0 %367
    %371 = vset.pattern.permute.xlu0 0
    %372 = vperm.xlu0 %371, %v354
    %v373 = vpop.permute.xlu0 %372
    %376 = vset.pattern.permute.xlu0 0
    %377 = vperm.xlu0 %376, %v355
    %v378 = vpop.permute.xlu0 %377
    %381 = vset.pattern.permute.xlu0 0
    %382 = vperm.xlu0 %381, %v356
    %v383 = vpop.permute.xlu0 %382
    %v385 = vmul.f32 %v170, %v368
    %v386 = vmul.f32 %v172, %v368
    %v387 = vmul.f32 %v259, %v368
    %v388 = vmul.f32 %v176, %v373
    %v389 = vmul.f32 %v178, %v373
    %v390 = vmul.f32 %v264, %v373
    %v391 = vmul.f32 %v182, %v378
    %v392 = vmul.f32 %v184, %v378
    %v393 = vmul.f32 %v269, %v378
    %v394 = vmul.f32 %v188, %v383
    %v395 = vmul.f32 %v190, %v383
    %v396 = vmul.f32 %v274, %v383
    %398 = vset.pattern.permute.xlu0 0
    %399 = vperm.xlu0 %398, %v361
    %v400 = vpop.permute.xlu0 %399
    %403 = vset.pattern.permute.xlu0 0
    %404 = vperm.xlu0 %403, %v362
    %v405 = vpop.permute.xlu0 %404
    %408 = vset.pattern.permute.xlu0 0
    %409 = vperm.xlu0 %408, %v363
    %v410 = vpop.permute.xlu0 %409
    %413 = vset.pattern.permute.xlu0 0
    %414 = vperm.xlu0 %413, %v364
    %v415 = vpop.permute.xlu0 %414
    %v417 = vadd.f32 %v385, %v400
    %v418 = vadd.f32 %v386, %v400
    %v419 = vadd.f32 %v387, %v400
    %v420 = vadd.f32 %v388, %v405
    %v421 = vadd.f32 %v389, %v405
    %v422 = vadd.f32 %v390, %v405
    %v423 = vadd.f32 %v391, %v410
    %v424 = vadd.f32 %v392, %v410
    %v425 = vadd.f32 %v393, %v410
    %v426 = vadd.f32 %v394, %v415
    %v427 = vadd.f32 %v395, %v415
    %v428 = vadd.f32 %v396, %v415
    %v429 = vmul.f32 %v353, 0.0
    %v430 = vmul.f32 %v354, 0.0
    %v431 = vmul.f32 %v355, 0.0
    %v432 = vmul.f32 %v356, 0.0
    %v433 = vadd.f32 %v429, %v361
    %v434 = vadd.f32 %v430, %v362
    %v435 = vadd.f32 %v431, %v363
    %v436 = vadd.f32 %v432, %v364
    %v437 = vmax.f32 %v417, 0.0
    %v438 = vmax.f32 %v418, 0.0
    %v439 = vmax.f32 %v419, 0.0
    %v440 = vmax.f32 %v420, 0.0
    %v441 = vmax.f32 %v421, 0.0
    %v442 = vmax.f32 %v422, 0.0
    %v443 = vmax.f32 %v423, 0.0
    %v444 = vmax.f32 %v424, 0.0
    %v445 = vmax.f32 %v425, 0.0
    %v446 = vmax.f32 %v426, 0.0
    %v447 = vmax.f32 %v427, 0.0
    %v448 = vmax.f32 %v428, 0.0
    %v449 = vmax.f32 %v433, 0.0
    %v450 = vmax.f32 %v434, 0.0
    %v451 = vmax.f32 %v435, 0.0
    %v452 = vmax.f32 %v436, 0.0
    loop: start=0, step=1, limit=2
    $region54: #{tpu_custom_call.1} parent=1 // loop_pre_header
      _
    $region55: #{tpu_custom_call.1} parent=1 // loop_header
      %s454 = sphi 0, %s458
      %p455 = scmp.ge.s32.totalorder %s454, 2
      %v459 = vphi %v437, %v1409
      %v460 = vphi %v438, %v1410
      %v461 = vphi %v439, %v1411
      %v462 = vphi %v440, %v1412
      %v463 = vphi %v441, %v1413
      %v464 = vphi %v442, %v1414
      %v465 = vphi %v443, %v1415
      %v466 = vphi %v444, %v1416
      %v467 = vphi %v445, %v1417
      %v468 = vphi %v446, %v1418
      %v469 = vphi %v447, %v1419
      %v470 = vphi %v448, %v1420
      %v471 = vphi %v449, %v1421
      %v472 = vphi %v450, %v1422
      %v473 = vphi %v451, %v1423
      %v474 = vphi %v452, %v1424
    $region56: #{tpu_custom_call.1} parent=1 // loop_header_branch
      %457 = sbr.rel (%p455) target = $region60
    $region57: #{tpu_custom_call.1} parent=1 // loop_body
      %s475 = smul.u32 %s454, 32
      %s476 = scalar_lea.vmem %s4, %s475
      %v477 = vld [vmem:[%s476] sm:$0xff]
      %v478 = vld [vmem:[%s476 + $0x8] sm:$0xff]
      %v479 = vld [vmem:[%s476 + $0x10] sm:$0xff]
      %v480 = vld [vmem:[%s476 + $0x18] sm:$0xff]
      %vm481 = vcmask 261120
      %v483 = vsel %vm481, %v477, 0
      %v486 = vsel %vm481, %v478, 0
      %v489 = vsel %vm481, %v479, 0
      %v492 = vsel %vm481, %v480, 0
      %494 = vmatprep.subr.mxu0 0.0
      %495 = vmatpush1.msra.mxu0 0.0
      %496 = vmatprep.subr.mxu0 0.0
      %497 = vmatpush1.msra.mxu0 0.0
      %498 = vmatprep.subr.mxu0 0.0
      %499 = vmatpush1.msra.mxu0 0.0
      %500 = vmatprep.subr.mxu0 0.0
      %501 = vmatpush1.msra.mxu0 0.0
      %502 = vmatprep.subr.mxu0 0.0
      %503 = vmatpush1.msra.mxu0 0.0
      %504 = vmatprep.subr.mxu0 0.0
      %505 = vmatpush1.msra.mxu0 0.0
      %506 = vmatprep.subr.mxu0 0.0
      %507 = vmatpush1.msra.mxu0 0.0
      %508 = vmatprep.subr.mxu0 0.0
      %509 = vmatpush1.msra.mxu0 0.0
      %510 = vmatprep.subr.mxu0 0.0
      %511 = vmatpush1.msra.mxu0 0.0
      %512 = vmatprep.subr.mxu0 0.0
      %513 = vmatpush1.msra.mxu0 0.0
      %514 = vmatprep.subr.mxu0 0.0
      %515 = vmatpush1.msra.mxu0 0.0
      %516 = vmatprep.subr.mxu0 0.0
      %517 = vmatpush1.msra.mxu0 0.0
      %518 = vmatprep.subr.mxu0 %v469
      %519 = vmatpush1.msra.mxu0 %v468
      %520 = vmatprep.subr.mxu0 %v466
      %521 = vmatpush1.msra.mxu0 %v465
      %522 = vmatprep.subr.mxu0 %v463
      %523 = vmatpush1.msra.mxu0 %v462
      %524 = vmatprep.subr.mxu0 %v460
      %525 = vmatpush1.msra.mxu0 %v459
      %526 = vmatprep.subr.mxu0 0.0
      %527 = vmatpush2.msra.mxu0 0.0
      %528 = vmatprep.subr.mxu0 0.0
      %529 = vmatpush2.msra.mxu0 0.0
      %530 = vmatprep.subr.mxu0 0.0
      %531 = vmatpush2.msra.mxu0 0.0
      %532 = vmatprep.subr.mxu0 0.0
      %533 = vmatpush2.msra.mxu0 0.0
      %534 = vmatprep.subr.mxu0 0.0
      %535 = vmatpush2.msra.mxu0 0.0
      %536 = vmatprep.subr.mxu0 0.0
      %537 = vmatpush2.msra.mxu0 0.0
      %538 = vmatprep.subr.mxu0 0.0
      %539 = vmatpush2.msra.mxu0 0.0
      %540 = vmatprep.subr.mxu0 0.0
      %541 = vmatpush2.msra.mxu0 0.0
      %542 = vmatprep.subr.mxu0 0.0
      %543 = vmatpush2.msra.mxu0 0.0
      %544 = vmatprep.subr.mxu0 0.0
      %545 = vmatpush2.msra.mxu0 0.0
      %546 = vmatprep.subr.mxu0 0.0
      %547 = vmatpush2.msra.mxu0 0.0
      %548 = vmatprep.subr.mxu0 0.0
      %549 = vmatpush2.msra.mxu0 0.0
      %550 = vmatprep.subr.mxu0 0.0
      %551 = vmatpush2.msra.mxu0 0.0
      %552 = vmatprep.subr.mxu0 0.0
      %553 = vmatpush2.msra.mxu0 0.0
      %554 = vmatprep.subr.mxu0 0.0
      %555 = vmatpush2.msra.mxu0 0.0
      %556 = vmatprep.subr.mxu0 0.0
      %557 = vmatpush2.msra.mxu0 0.0
      %558 = vmatprep.mubr.f32.mxu0 0.0
      %559 = vmatmul.mubr.f32.gmra.mxu0 %v483
      %v560 = vpop.f32.mrf.mxu0
      %v561 = vadd.f32 0.0, %v560
      %v562 = vpop.f32.mrf.mxu0
      %v563 = vadd.f32 0.0, %v562
      %564 = vmatprep.mubr.f32.mxu0 0.0
      %565 = vmatmul.mubr.f32.gmra.mxu0 %v486
      %v566 = vpop.f32.mrf.mxu0
      %v567 = vadd.f32 0.0, %v566
      %v568 = vpop.f32.mrf.mxu0
      %v569 = vadd.f32 0.0, %v568
      %570 = vmatprep.mubr.f32.mxu0 0.0
      %571 = vmatmul.mubr.f32.gmra.mxu0 %v489
      %v572 = vpop.f32.mrf.mxu0
      %v573 = vadd.f32 0.0, %v572
      %v574 = vpop.f32.mrf.mxu0
      %v575 = vadd.f32 0.0, %v574
      %576 = vmatprep.mubr.f32.mxu0 0.0
      %577 = vmatmul.mubr.f32.gmra.mxu0 %v492
      %v578 = vpop.f32.mrf.mxu0
      %v579 = vadd.f32 0.0, %v578
      %v580 = vpop.f32.mrf.mxu0
      %v581 = vadd.f32 0.0, %v580
      %582 = vdwg.mxu0
      %583 = vmatprep.subr.mxu0 0.0
      %584 = vmatpush1.msra.mxu0 0.0
      %585 = vmatprep.subr.mxu0 0.0
      %586 = vmatpush1.msra.mxu0 0.0
      %587 = vmatprep.subr.mxu0 0.0
      %588 = vmatpush1.msra.mxu0 0.0
      %589 = vmatprep.subr.mxu0 0.0
      %590 = vmatpush1.msra.mxu0 0.0
      %591 = vmatprep.subr.mxu0 0.0
      %592 = vmatpush1.msra.mxu0 0.0
      %593 = vmatprep.subr.mxu0 0.0
      %594 = vmatpush1.msra.mxu0 0.0
      %595 = vmatprep.subr.mxu0 0.0
      %596 = vmatpush1.msra.mxu0 0.0
      %597 = vmatprep.subr.mxu0 0.0
      %598 = vmatpush1.msra.mxu0 0.0
      %599 = vmatprep.subr.mxu0 0.0
      %600 = vmatpush1.msra.mxu0 0.0
      %601 = vmatprep.subr.mxu0 0.0
      %602 = vmatpush1.msra.mxu0 0.0
      %603 = vmatprep.subr.mxu0 0.0
      %604 = vmatpush1.msra.mxu0 0.0
      %605 = vmatprep.subr.mxu0 0.0
      %606 = vmatpush1.msra.mxu0 0.0
      %607 = vmatprep.subr.mxu0 0.0
      %608 = vmatpush1.msra.mxu0 %v470
      %609 = vmatprep.subr.mxu0 0.0
      %610 = vmatpush1.msra.mxu0 %v467
      %611 = vmatprep.subr.mxu0 0.0
      %612 = vmatpush1.msra.mxu0 %v464
      %613 = vmatprep.subr.mxu0 0.0
      %614 = vmatpush1.msra.mxu0 %v461
      %615 = vmatprep.subr.mxu0 0.0
      %616 = vmatpush2.msra.mxu0 0.0
      %617 = vmatprep.subr.mxu0 0.0
      %618 = vmatpush2.msra.mxu0 0.0
      %619 = vmatprep.subr.mxu0 0.0
      %620 = vmatpush2.msra.mxu0 0.0
      %621 = vmatprep.subr.mxu0 0.0
      %622 = vmatpush2.msra.mxu0 0.0
      %623 = vmatprep.subr.mxu0 0.0
      %624 = vmatpush2.msra.mxu0 0.0
      %625 = vmatprep.subr.mxu0 0.0
      %626 = vmatpush2.msra.mxu0 0.0
      %627 = vmatprep.subr.mxu0 0.0
      %628 = vmatpush2.msra.mxu0 0.0
      %629 = vmatprep.subr.mxu0 0.0
      %630 = vmatpush2.msra.mxu0 0.0
      %631 = vmatprep.subr.mxu0 0.0
      %632 = vmatpush2.msra.mxu0 0.0
      %633 = vmatprep.subr.mxu0 0.0
      %634 = vmatpush2.msra.mxu0 0.0
      %635 = vmatprep.subr.mxu0 0.0
      %636 = vmatpush2.msra.mxu0 0.0
      %637 = vmatprep.subr.mxu0 0.0
      %638 = vmatpush2.msra.mxu0 0.0
      %639 = vmatprep.subr.mxu0 0.0
      %640 = vmatpush2.msra.mxu0 0.0
      %641 = vmatprep.subr.mxu0 0.0
      %642 = vmatpush2.msra.mxu0 0.0
      %643 = vmatprep.subr.mxu0 0.0
      %644 = vmatpush2.msra.mxu0 0.0
      %645 = vmatprep.subr.mxu0 0.0
      %646 = vmatpush2.msra.mxu0 0.0
      %647 = vmatprep.mubr.f32.mxu0 0.0
      %648 = vmatmul.mubr.f32.gmra.mxu0 %v483
      %v649 = vpop.f32.mrf.mxu0
      %v650 = vadd.f32 0.0, %v649
      %v651 = vpop.f32.mrf.mxu0
      %652 = vmatprep.mubr.f32.mxu0 0.0
      %653 = vmatmul.mubr.f32.gmra.mxu0 %v486
      %v654 = vpop.f32.mrf.mxu0
      %v655 = vadd.f32 0.0, %v654
      %v656 = vpop.f32.mrf.mxu0
      %657 = vmatprep.mubr.f32.mxu0 0.0
      %658 = vmatmul.mubr.f32.gmra.mxu0 %v489
      %v659 = vpop.f32.mrf.mxu0
      %v660 = vadd.f32 0.0, %v659
      %v661 = vpop.f32.mrf.mxu0
      %662 = vmatprep.mubr.f32.mxu0 0.0
      %663 = vmatmul.mubr.f32.gmra.mxu0 %v492
      %v664 = vpop.f32.mrf.mxu0
      %v665 = vadd.f32 0.0, %v664
      %v666 = vpop.f32.mrf.mxu0
      %667 = vdwg.mxu0
      %668 = vmatprep.subr.mxu0 0.0
      %669 = vmatpush1.msra.mxu0 0.0
      %670 = vmatprep.subr.mxu0 0.0
      %671 = vmatpush1.msra.mxu0 0.0
      %672 = vmatprep.subr.mxu0 0.0
      %673 = vmatpush1.msra.mxu0 0.0
      %674 = vmatprep.subr.mxu0 0.0
      %675 = vmatpush1.msra.mxu0 0.0
      %676 = vmatprep.subr.mxu0 0.0
      %677 = vmatpush1.msra.mxu0 0.0
      %678 = vmatprep.subr.mxu0 0.0
      %679 = vmatpush1.msra.mxu0 0.0
      %680 = vmatprep.subr.mxu0 0.0
      %681 = vmatpush1.msra.mxu0 0.0
      %682 = vmatprep.subr.mxu0 0.0
      %683 = vmatpush1.msra.mxu0 0.0
      %684 = vmatprep.subr.mxu0 0.0
      %685 = vmatpush1.msra.mxu0 0.0
      %686 = vmatprep.subr.mxu0 0.0
      %687 = vmatpush1.msra.mxu0 0.0
      %688 = vmatprep.subr.mxu0 0.0
      %689 = vmatpush1.msra.mxu0 0.0
      %690 = vmatprep.subr.mxu0 0.0
      %691 = vmatpush1.msra.mxu0 0.0
      %692 = vmatprep.subr.mxu0 0.0
      %693 = vmatpush1.msra.mxu0 %v474
      %694 = vmatprep.subr.mxu0 0.0
      %695 = vmatpush1.msra.mxu0 %v473
      %696 = vmatprep.subr.mxu0 0.0
      %697 = vmatpush1.msra.mxu0 %v472
      %698 = vmatprep.subr.mxu0 0.0
      %699 = vmatpush1.msra.mxu0 %v471
      %700 = vmatprep.subr.mxu0 0.0
      %701 = vmatpush2.msra.mxu0 0.0
      %702 = vmatprep.subr.mxu0 0.0
      %703 = vmatpush2.msra.mxu0 0.0
      %704 = vmatprep.subr.mxu0 0.0
      %705 = vmatpush2.msra.mxu0 0.0
      %706 = vmatprep.subr.mxu0 0.0
      %707 = vmatpush2.msra.mxu0 0.0
      %708 = vmatprep.subr.mxu0 0.0
      %709 = vmatpush2.msra.mxu0 0.0
      %710 = vmatprep.subr.mxu0 0.0
      %711 = vmatpush2.msra.mxu0 0.0
      %712 = vmatprep.subr.mxu0 0.0
      %713 = vmatpush2.msra.mxu0 0.0
      %714 = vmatprep.subr.mxu0 0.0
      %715 = vmatpush2.msra.mxu0 0.0
      %716 = vmatprep.subr.mxu0 0.0
      %717 = vmatpush2.msra.mxu0 0.0
      %718 = vmatprep.subr.mxu0 0.0
      %719 = vmatpush2.msra.mxu0 0.0
      %720 = vmatprep.subr.mxu0 0.0
      %721 = vmatpush2.msra.mxu0 0.0
      %722 = vmatprep.subr.mxu0 0.0
      %723 = vmatpush2.msra.mxu0 0.0
      %724 = vmatprep.subr.mxu0 0.0
      %725 = vmatpush2.msra.mxu0 0.0
      %726 = vmatprep.subr.mxu0 0.0
      %727 = vmatpush2.msra.mxu0 0.0
      %728 = vmatprep.subr.mxu0 0.0
      %729 = vmatpush2.msra.mxu0 0.0
      %730 = vmatprep.subr.mxu0 0.0
      %731 = vmatpush2.msra.mxu0 0.0
      %732 = vmatprep.mubr.f32.mxu0 0.0
      %733 = vmatmul.mubr.f32.gmra.mxu0 %v483
      %v734 = vpop.f32.mrf.mxu0
      %v735 = vadd.f32 0.0, %v734
      %v736 = vpop.f32.mrf.mxu0
      %737 = vmatprep.mubr.f32.mxu0 0.0
      %738 = vmatmul.mubr.f32.gmra.mxu0 %v486
      %v739 = vpop.f32.mrf.mxu0
      %v740 = vadd.f32 0.0, %v739
      %v741 = vpop.f32.mrf.mxu0
      %742 = vmatprep.mubr.f32.mxu0 0.0
      %743 = vmatmul.mubr.f32.gmra.mxu0 %v489
      %v744 = vpop.f32.mrf.mxu0
      %v745 = vadd.f32 0.0, %v744
      %v746 = vpop.f32.mrf.mxu0
      %747 = vmatprep.mubr.f32.mxu0 0.0
      %748 = vmatmul.mubr.f32.gmra.mxu0 %v492
      %v749 = vpop.f32.mrf.mxu0
      %v750 = vadd.f32 0.0, %v749
      %v751 = vpop.f32.mrf.mxu0
      %752 = vdwg.mxu0
      %s753 = scalar_lea.vmem %s5, %s475
      %v754 = vld [vmem:[%s753] sm:$0xff]
      %v755 = vld [vmem:[%s753 + $0x8] sm:$0xff]
      %v756 = vld [vmem:[%s753 + $0x10] sm:$0xff]
      %v757 = vld [vmem:[%s753 + $0x18] sm:$0xff]
      %s758 = scalar_lea.vmem %s6, %s475
      %v759 = vld [vmem:[%s758] sm:$0xff]
      %v760 = vld [vmem:[%s758 + $0x8] sm:$0xff]
      %v761 = vld [vmem:[%s758 + $0x10] sm:$0xff]
      %v762 = vld [vmem:[%s758 + $0x18] sm:$0xff]
      %v763 = vadd.f32 %v561, %v563
      %v764 = vadd.f32 %v763, %v650
      %765 = vadd.xlane.f32.xlu0 %v764
      %v766 = vpop.xlane.xlu0 %765
      %v767 = vadd.f32 %v567, %v569
      %v768 = vadd.f32 %v767, %v655
      %769 = vadd.xlane.f32.xlu0 %v768
      %v770 = vpop.xlane.xlu0 %769
      %v771 = vadd.f32 %v573, %v575
      %v772 = vadd.f32 %v771, %v660
      %773 = vadd.xlane.f32.xlu0 %v772
      %v774 = vpop.xlane.xlu0 %773
      %v775 = vadd.f32 %v579, %v581
      %v776 = vadd.f32 %v775, %v665
      %777 = vadd.xlane.f32.xlu0 %v776
      %v778 = vpop.xlane.xlu0 %777
      %v779 = vmul.f32 %v735, 124.0
      %v780 = vmul.f32 %v740, 124.0
      %v781 = vmul.f32 %v745, 124.0
      %v782 = vmul.f32 %v750, 124.0
      %v783 = vsub.f32 %v766, %v779
      %v784 = vsub.f32 %v770, %v780
      %v785 = vsub.f32 %v774, %v781
      %v786 = vsub.f32 %v778, %v782
      %v787 = vmul.f32 %v561, %v561
      %v788 = vmul.f32 %v563, %v563
      %v789 = vmul.f32 %v650, %v650
      %v790 = vmul.f32 %v567, %v567
      %v791 = vmul.f32 %v569, %v569
      %v792 = vmul.f32 %v655, %v655
      %v793 = vmul.f32 %v573, %v573
      %v794 = vmul.f32 %v575, %v575
      %v795 = vmul.f32 %v660, %v660
      %v796 = vmul.f32 %v579, %v579
      %v797 = vmul.f32 %v581, %v581
      %v798 = vmul.f32 %v665, %v665
      %v799 = vadd.f32 %v787, %v788
      %v800 = vadd.f32 %v799, %v789
      %801 = vadd.xlane.f32.xlu0 %v800
      %v802 = vpop.xlane.xlu0 %801
      %v803 = vadd.f32 %v790, %v791
      %v804 = vadd.f32 %v803, %v792
      %805 = vadd.xlane.f32.xlu0 %v804
      %v806 = vpop.xlane.xlu0 %805
      %v807 = vadd.f32 %v793, %v794
      %v808 = vadd.f32 %v807, %v795
      %809 = vadd.xlane.f32.xlu0 %v808
      %v810 = vpop.xlane.xlu0 %809
      %v811 = vadd.f32 %v796, %v797
      %v812 = vadd.f32 %v811, %v798
      %813 = vadd.xlane.f32.xlu0 %v812
      %v814 = vpop.xlane.xlu0 %813
      %v815 = vmul.f32 %v735, %v735
      %v816 = vmul.f32 %v740, %v740
      %v817 = vmul.f32 %v745, %v745
      %v818 = vmul.f32 %v750, %v750
      %v819 = vmul.f32 %v815, 124.0
      %v820 = vmul.f32 %v816, 124.0
      %v821 = vmul.f32 %v817, 124.0
      %v822 = vmul.f32 %v818, 124.0
      %v823 = vsub.f32 %v802, %v819
      %v824 = vsub.f32 %v806, %v820
      %v825 = vsub.f32 %v810, %v821
      %v826 = vsub.f32 %v814, %v822
      %v827 = vmul.f32 %v783, 0.0038461538
      %v828 = vmul.f32 %v784, 0.0038461538
      %v829 = vmul.f32 %v785, 0.0038461538
      %v830 = vmul.f32 %v786, 0.0038461538
      %v831 = vmul.f32 %v823, 0.0038461538
      %v832 = vmul.f32 %v824, 0.0038461538
      %v833 = vmul.f32 %v825, 0.0038461538
      %v834 = vmul.f32 %v826, 0.0038461538
      %v835 = vmul.f32 %v827, %v827
      %v836 = vmul.f32 %v828, %v828
      %v837 = vmul.f32 %v829, %v829
      %v838 = vmul.f32 %v830, %v830
      %v839 = vsub.f32 %v831, %v835
      %v840 = vsub.f32 %v832, %v836
      %v841 = vsub.f32 %v833, %v837
      %v842 = vsub.f32 %v834, %v838
      %v843 = vadd.f32 %v839, 1e-05
      %v844 = vadd.f32 %v840, 1e-05
      %v845 = vadd.f32 %v841, 1e-05
      %v846 = vadd.f32 %v842, 1e-05
      %v847 = vrsqrt.pop %v843
      %v848 = vrsqrt.pop %v844
      %v849 = vrsqrt.pop %v845
      %v850 = vrsqrt.pop %v846
      %v851 = vmul.f32 %v754, %v847
      %v852 = vmul.f32 %v755, %v848
      %v853 = vmul.f32 %v756, %v849
      %v854 = vmul.f32 %v757, %v850
      %v855 = vmul.f32 %v827, %v851
      %v856 = vmul.f32 %v828, %v852
      %v857 = vmul.f32 %v829, %v853
      %v858 = vmul.f32 %v830, %v854
      %v859 = vsub.f32 %v759, %v855
      %v860 = vsub.f32 %v760, %v856
      %v861 = vsub.f32 %v761, %v857
      %v862 = vsub.f32 %v762, %v858
      %864 = vset.pattern.permute.xlu0 0
      %865 = vperm.xlu0 %864, %v851
      %v866 = vpop.permute.xlu0 %865
      %869 = vset.pattern.permute.xlu0 0
      %870 = vperm.xlu0 %869, %v852
      %v871 = vpop.permute.xlu0 %870
      %874 = vset.pattern.permute.xlu0 0
      %875 = vperm.xlu0 %874, %v853
      %v876 = vpop.permute.xlu0 %875
      %879 = vset.pattern.permute.xlu0 0
      %880 = vperm.xlu0 %879, %v854
      %v881 = vpop.permute.xlu0 %880
      %v883 = vmul.f32 %v561, %v866
      %v884 = vmul.f32 %v563, %v866
      %v885 = vmul.f32 %v650, %v866
      %v886 = vmul.f32 %v567, %v871
      %v887 = vmul.f32 %v569, %v871
      %v888 = vmul.f32 %v655, %v871
      %v889 = vmul.f32 %v573, %v876
      %v890 = vmul.f32 %v575, %v876
      %v891 = vmul.f32 %v660, %v876
      %v892 = vmul.f32 %v579, %v881
      %v893 = vmul.f32 %v581, %v881
      %v894 = vmul.f32 %v665, %v881
      %896 = vset.pattern.permute.xlu0 0
      %897 = vperm.xlu0 %896, %v859
      %v898 = vpop.permute.xlu0 %897
      %901 = vset.pattern.permute.xlu0 0
      %902 = vperm.xlu0 %901, %v860
      %v903 = vpop.permute.xlu0 %902
      %906 = vset.pattern.permute.xlu0 0
      %907 = vperm.xlu0 %906, %v861
      %v908 = vpop.permute.xlu0 %907
      %911 = vset.pattern.permute.xlu0 0
      %912 = vperm.xlu0 %911, %v862
      %v913 = vpop.permute.xlu0 %912
      %v915 = vadd.f32 %v883, %v898
      %v916 = vadd.f32 %v884, %v898
      %v917 = vadd.f32 %v885, %v898
      %v918 = vadd.f32 %v886, %v903
      %v919 = vadd.f32 %v887, %v903
      %v920 = vadd.f32 %v888, %v903
      %v921 = vadd.f32 %v889, %v908
      %v922 = vadd.f32 %v890, %v908
      %v923 = vadd.f32 %v891, %v908
      %v924 = vadd.f32 %v892, %v913
      %v925 = vadd.f32 %v893, %v913
      %v926 = vadd.f32 %v894, %v913
      %v927 = vmul.f32 %v735, %v851
      %v928 = vmul.f32 %v740, %v852
      %v929 = vmul.f32 %v745, %v853
      %v930 = vmul.f32 %v750, %v854
      %v931 = vadd.f32 %v927, %v859
      %v932 = vadd.f32 %v928, %v860
      %v933 = vadd.f32 %v929, %v861
      %v934 = vadd.f32 %v930, %v862
      %v935 = vmax.f32 %v915, 0.0
      %v936 = vmax.f32 %v916, 0.0
      %v937 = vmax.f32 %v917, 0.0
      %v938 = vmax.f32 %v918, 0.0
      %v939 = vmax.f32 %v919, 0.0
      %v940 = vmax.f32 %v920, 0.0
      %v941 = vmax.f32 %v921, 0.0
      %v942 = vmax.f32 %v922, 0.0
      %v943 = vmax.f32 %v923, 0.0
      %v944 = vmax.f32 %v924, 0.0
      %v945 = vmax.f32 %v925, 0.0
      %v946 = vmax.f32 %v926, 0.0
      %v947 = vmax.f32 %v931, 0.0
      %v948 = vmax.f32 %v932, 0.0
      %v949 = vmax.f32 %v933, 0.0
      %v950 = vmax.f32 %v934, 0.0
      %s951 = scalar_lea.vmem [#allocation2], %s475
      %v952 = vld [vmem:[%s951] sm:$0xff]
      %v953 = vld [vmem:[%s951 + $0x8] sm:$0xff]
      %v954 = vld [vmem:[%s951 + $0x10] sm:$0xff]
      %v955 = vld [vmem:[%s951 + $0x18] sm:$0xff]
      %v957 = vsel %vm481, %v952, 0
      %v960 = vsel %vm481, %v953, 0
      %v963 = vsel %vm481, %v954, 0
      %v966 = vsel %vm481, %v955, 0
      %968 = vmatprep.subr.mxu0 0.0
      %969 = vmatpush1.msra.mxu0 0.0
      %970 = vmatprep.subr.mxu0 0.0
      %971 = vmatpush1.msra.mxu0 0.0
      %972 = vmatprep.subr.mxu0 0.0
      %973 = vmatpush1.msra.mxu0 0.0
      %974 = vmatprep.subr.mxu0 0.0
      %975 = vmatpush1.msra.mxu0 0.0
      %976 = vmatprep.subr.mxu0 0.0
      %977 = vmatpush1.msra.mxu0 0.0
      %978 = vmatprep.subr.mxu0 0.0
      %979 = vmatpush1.msra.mxu0 0.0
      %980 = vmatprep.subr.mxu0 0.0
      %981 = vmatpush1.msra.mxu0 0.0
      %982 = vmatprep.subr.mxu0 0.0
      %983 = vmatpush1.msra.mxu0 0.0
      %984 = vmatprep.subr.mxu0 0.0
      %985 = vmatpush1.msra.mxu0 0.0
      %986 = vmatprep.subr.mxu0 0.0
      %987 = vmatpush1.msra.mxu0 0.0
      %988 = vmatprep.subr.mxu0 0.0
      %989 = vmatpush1.msra.mxu0 0.0
      %990 = vmatprep.subr.mxu0 0.0
      %991 = vmatpush1.msra.mxu0 0.0
      %992 = vmatprep.subr.mxu0 %v945
      %993 = vmatpush1.msra.mxu0 %v944
      %994 = vmatprep.subr.mxu0 %v942
      %995 = vmatpush1.msra.mxu0 %v941
      %996 = vmatprep.subr.mxu0 %v939
      %997 = vmatpush1.msra.mxu0 %v938
      %998 = vmatprep.subr.mxu0 %v936
      %999 = vmatpush1.msra.mxu0 %v935
      %1000 = vmatprep.subr.mxu0 0.0
      %1001 = vmatpush2.msra.mxu0 0.0
      %1002 = vmatprep.subr.mxu0 0.0
      %1003 = vmatpush2.msra.mxu0 0.0
      %1004 = vmatprep.subr.mxu0 0.0
      %1005 = vmatpush2.msra.mxu0 0.0
      %1006 = vmatprep.subr.mxu0 0.0
      %1007 = vmatpush2.msra.mxu0 0.0
      %1008 = vmatprep.subr.mxu0 0.0
      %1009 = vmatpush2.msra.mxu0 0.0
      %1010 = vmatprep.subr.mxu0 0.0
      %1011 = vmatpush2.msra.mxu0 0.0
      %1012 = vmatprep.subr.mxu0 0.0
      %1013 = vmatpush2.msra.mxu0 0.0
      %1014 = vmatprep.subr.mxu0 0.0
      %1015 = vmatpush2.msra.mxu0 0.0
      %1016 = vmatprep.subr.mxu0 0.0
      %1017 = vmatpush2.msra.mxu0 0.0
      %1018 = vmatprep.subr.mxu0 0.0
      %1019 = vmatpush2.msra.mxu0 0.0
      %1020 = vmatprep.subr.mxu0 0.0
      %1021 = vmatpush2.msra.mxu0 0.0
      %1022 = vmatprep.subr.mxu0 0.0
      %1023 = vmatpush2.msra.mxu0 0.0
      %1024 = vmatprep.subr.mxu0 0.0
      %1025 = vmatpush2.msra.mxu0 0.0
      %1026 = vmatprep.subr.mxu0 0.0
      %1027 = vmatpush2.msra.mxu0 0.0
      %1028 = vmatprep.subr.mxu0 0.0
      %1029 = vmatpush2.msra.mxu0 0.0
      %1030 = vmatprep.subr.mxu0 0.0
      %1031 = vmatpush2.msra.mxu0 0.0
      %1032 = vmatprep.mubr.f32.mxu0 0.0
      %1033 = vmatmul.mubr.f32.gmra.mxu0 %v957
      %v1034 = vpop.f32.mrf.mxu0
      %v1035 = vadd.f32 0.0, %v1034
      %v1036 = vpop.f32.mrf.mxu0
      %v1037 = vadd.f32 0.0, %v1036
      %1038 = vmatprep.mubr.f32.mxu0 0.0
      %1039 = vmatmul.mubr.f32.gmra.mxu0 %v960
      %v1040 = vpop.f32.mrf.mxu0
      %v1041 = vadd.f32 0.0, %v1040
      %v1042 = vpop.f32.mrf.mxu0
      %v1043 = vadd.f32 0.0, %v1042
      %1044 = vmatprep.mubr.f32.mxu0 0.0
      %1045 = vmatmul.mubr.f32.gmra.mxu0 %v963
      %v1046 = vpop.f32.mrf.mxu0
      %v1047 = vadd.f32 0.0, %v1046
      %v1048 = vpop.f32.mrf.mxu0
      %v1049 = vadd.f32 0.0, %v1048
      %1050 = vmatprep.mubr.f32.mxu0 0.0
      %1051 = vmatmul.mubr.f32.gmra.mxu0 %v966
      %v1052 = vpop.f32.mrf.mxu0
      %v1053 = vadd.f32 0.0, %v1052
      %v1054 = vpop.f32.mrf.mxu0
      %v1055 = vadd.f32 0.0, %v1054
      %1056 = vdwg.mxu0
      %1057 = vmatprep.subr.mxu0 0.0
      %1058 = vmatpush1.msra.mxu0 0.0
      %1059 = vmatprep.subr.mxu0 0.0
      %1060 = vmatpush1.msra.mxu0 0.0
      %1061 = vmatprep.subr.mxu0 0.0
      %1062 = vmatpush1.msra.mxu0 0.0
      %1063 = vmatprep.subr.mxu0 0.0
      %1064 = vmatpush1.msra.mxu0 0.0
      %1065 = vmatprep.subr.mxu0 0.0
      %1066 = vmatpush1.msra.mxu0 0.0
      %1067 = vmatprep.subr.mxu0 0.0
      %1068 = vmatpush1.msra.mxu0 0.0
      %1069 = vmatprep.subr.mxu0 0.0
      %1070 = vmatpush1.msra.mxu0 0.0
      %1071 = vmatprep.subr.mxu0 0.0
      %1072 = vmatpush1.msra.mxu0 0.0
      %1073 = vmatprep.subr.mxu0 0.0
      %1074 = vmatpush1.msra.mxu0 0.0
      %1075 = vmatprep.subr.mxu0 0.0
      %1076 = vmatpush1.msra.mxu0 0.0
      %1077 = vmatprep.subr.mxu0 0.0
      %1078 = vmatpush1.msra.mxu0 0.0
      %1079 = vmatprep.subr.mxu0 0.0
      %1080 = vmatpush1.msra.mxu0 0.0
      %1081 = vmatprep.subr.mxu0 0.0
      %1082 = vmatpush1.msra.mxu0 %v946
      %1083 = vmatprep.subr.mxu0 0.0
      %1084 = vmatpush1.msra.mxu0 %v943
      %1085 = vmatprep.subr.mxu0 0.0
      %1086 = vmatpush1.msra.mxu0 %v940
      %1087 = vmatprep.subr.mxu0 0.0
      %1088 = vmatpush1.msra.mxu0 %v937
      %1089 = vmatprep.subr.mxu0 0.0
      %1090 = vmatpush2.msra.mxu0 0.0
      %1091 = vmatprep.subr.mxu0 0.0
      %1092 = vmatpush2.msra.mxu0 0.0
      %1093 = vmatprep.subr.mxu0 0.0
      %1094 = vmatpush2.msra.mxu0 0.0
      %1095 = vmatprep.subr.mxu0 0.0
      %1096 = vmatpush2.msra.mxu0 0.0
      %1097 = vmatprep.subr.mxu0 0.0
      %1098 = vmatpush2.msra.mxu0 0.0
      %1099 = vmatprep.subr.mxu0 0.0
      %1100 = vmatpush2.msra.mxu0 0.0
      %1101 = vmatprep.subr.mxu0 0.0
      %1102 = vmatpush2.msra.mxu0 0.0
      %1103 = vmatprep.subr.mxu0 0.0
      %1104 = vmatpush2.msra.mxu0 0.0
      %1105 = vmatprep.subr.mxu0 0.0
      %1106 = vmatpush2.msra.mxu0 0.0
      %1107 = vmatprep.subr.mxu0 0.0
      %1108 = vmatpush2.msra.mxu0 0.0
      %1109 = vmatprep.subr.mxu0 0.0
      %1110 = vmatpush2.msra.mxu0 0.0
      %1111 = vmatprep.subr.mxu0 0.0
      %1112 = vmatpush2.msra.mxu0 0.0
      %1113 = vmatprep.subr.mxu0 0.0
      %1114 = vmatpush2.msra.mxu0 0.0
      %1115 = vmatprep.subr.mxu0 0.0
      %1116 = vmatpush2.msra.mxu0 0.0
      %1117 = vmatprep.subr.mxu0 0.0
      %1118 = vmatpush2.msra.mxu0 0.0
      %1119 = vmatprep.subr.mxu0 0.0
      %1120 = vmatpush2.msra.mxu0 0.0
      %1121 = vmatprep.mubr.f32.mxu0 0.0
      %1122 = vmatmul.mubr.f32.gmra.mxu0 %v957
      %v1123 = vpop.f32.mrf.mxu0
      %v1124 = vadd.f32 0.0, %v1123
      %v1125 = vpop.f32.mrf.mxu0
      %1126 = vmatprep.mubr.f32.mxu0 0.0
      %1127 = vmatmul.mubr.f32.gmra.mxu0 %v960
      %v1128 = vpop.f32.mrf.mxu0
      %v1129 = vadd.f32 0.0, %v1128
      %v1130 = vpop.f32.mrf.mxu0
      %1131 = vmatprep.mubr.f32.mxu0 0.0
      %1132 = vmatmul.mubr.f32.gmra.mxu0 %v963
      %v1133 = vpop.f32.mrf.mxu0
      %v1134 = vadd.f32 0.0, %v1133
      %v1135 = vpop.f32.mrf.mxu0
      %1136 = vmatprep.mubr.f32.mxu0 0.0
      %1137 = vmatmul.mubr.f32.gmra.mxu0 %v966
      %v1138 = vpop.f32.mrf.mxu0
      %v1139 = vadd.f32 0.0, %v1138
      %v1140 = vpop.f32.mrf.mxu0
      %1141 = vdwg.mxu0
      %1142 = vmatprep.subr.mxu0 0.0
      %1143 = vmatpush1.msra.mxu0 0.0
      %1144 = vmatprep.subr.mxu0 0.0
      %1145 = vmatpush1.msra.mxu0 0.0
      %1146 = vmatprep.subr.mxu0 0.0
      %1147 = vmatpush1.msra.mxu0 0.0
      %1148 = vmatprep.subr.mxu0 0.0
      %1149 = vmatpush1.msra.mxu0 0.0
      %1150 = vmatprep.subr.mxu0 0.0
      %1151 = vmatpush1.msra.mxu0 0.0
      %1152 = vmatprep.subr.mxu0 0.0
      %1153 = vmatpush1.msra.mxu0 0.0
      %1154 = vmatprep.subr.mxu0 0.0
      %1155 = vmatpush1.msra.mxu0 0.0
      %1156 = vmatprep.subr.mxu0 0.0
      %1157 = vmatpush1.msra.mxu0 0.0
      %1158 = vmatprep.subr.mxu0 0.0
      %1159 = vmatpush1.msra.mxu0 0.0
      %1160 = vmatprep.subr.mxu0 0.0
      %1161 = vmatpush1.msra.mxu0 0.0
      %1162 = vmatprep.subr.mxu0 0.0
      %1163 = vmatpush1.msra.mxu0 0.0
      %1164 = vmatprep.subr.mxu0 0.0
      %1165 = vmatpush1.msra.mxu0 0.0
      %1166 = vmatprep.subr.mxu0 0.0
      %1167 = vmatpush1.msra.mxu0 %v950
      %1168 = vmatprep.subr.mxu0 0.0
      %1169 = vmatpush1.msra.mxu0 %v949
      %1170 = vmatprep.subr.mxu0 0.0
      %1171 = vmatpush1.msra.mxu0 %v948
      %1172 = vmatprep.subr.mxu0 0.0
      %1173 = vmatpush1.msra.mxu0 %v947
      %1174 = vmatprep.subr.mxu0 0.0
      %1175 = vmatpush2.msra.mxu0 0.0
      %1176 = vmatprep.subr.mxu0 0.0
      %1177 = vmatpush2.msra.mxu0 0.0
      %1178 = vmatprep.subr.mxu0 0.0
      %1179 = vmatpush2.msra.mxu0 0.0
      %1180 = vmatprep.subr.mxu0 0.0
      %1181 = vmatpush2.msra.mxu0 0.0
      %1182 = vmatprep.subr.mxu0 0.0
      %1183 = vmatpush2.msra.mxu0 0.0
      %1184 = vmatprep.subr.mxu0 0.0
      %1185 = vmatpush2.msra.mxu0 0.0
      %1186 = vmatprep.subr.mxu0 0.0
      %1187 = vmatpush2.msra.mxu0 0.0
      %1188 = vmatprep.subr.mxu0 0.0
      %1189 = vmatpush2.msra.mxu0 0.0
      %1190 = vmatprep.subr.mxu0 0.0
      %1191 = vmatpush2.msra.mxu0 0.0
      %1192 = vmatprep.subr.mxu0 0.0
      %1193 = vmatpush2.msra.mxu0 0.0
      %1194 = vmatprep.subr.mxu0 0.0
      %1195 = vmatpush2.msra.mxu0 0.0
      %1196 = vmatprep.subr.mxu0 0.0
      %1197 = vmatpush2.msra.mxu0 0.0
      %1198 = vmatprep.subr.mxu0 0.0
      %1199 = vmatpush2.msra.mxu0 0.0
      %1200 = vmatprep.subr.mxu0 0.0
      %1201 = vmatpush2.msra.mxu0 0.0
      %1202 = vmatprep.subr.mxu0 0.0
      %1203 = vmatpush2.msra.mxu0 0.0
      %1204 = vmatprep.subr.mxu0 0.0
      %1205 = vmatpush2.msra.mxu0 0.0
      %1206 = vmatprep.mubr.f32.mxu0 0.0
      %1207 = vmatmul.mubr.f32.gmra.mxu0 %v957
      %v1208 = vpop.f32.mrf.mxu0
      %v1209 = vadd.f32 0.0, %v1208
      %v1210 = vpop.f32.mrf.mxu0
      %1211 = vmatprep.mubr.f32.mxu0 0.0
      %1212 = vmatmul.mubr.f32.gmra.mxu0 %v960
      %v1213 = vpop.f32.mrf.mxu0
      %v1214 = vadd.f32 0.0, %v1213
      %v1215 = vpop.f32.mrf.mxu0
      %1216 = vmatprep.mubr.f32.mxu0 0.0
      %1217 = vmatmul.mubr.f32.gmra.mxu0 %v963
      %v1218 = vpop.f32.mrf.mxu0
      %v1219 = vadd.f32 0.0, %v1218
      %v1220 = vpop.f32.mrf.mxu0
      %1221 = vmatprep.mubr.f32.mxu0 0.0
      %1222 = vmatmul.mubr.f32.gmra.mxu0 %v966
      %v1223 = vpop.f32.mrf.mxu0
      %v1224 = vadd.f32 0.0, %v1223
      %v1225 = vpop.f32.mrf.mxu0
      %1226 = vdwg.mxu0
      %s1227 = scalar_lea.vmem %s8, %s475
      %v1228 = vld [vmem:[%s1227] sm:$0xff]
      %v1229 = vld [vmem:[%s1227 + $0x8] sm:$0xff]
      %v1230 = vld [vmem:[%s1227 + $0x10] sm:$0xff]
      %v1231 = vld [vmem:[%s1227 + $0x18] sm:$0xff]
      %s1232 = scalar_lea.vmem %s9, %s475
      %v1233 = vld [vmem:[%s1232] sm:$0xff]
      %v1234 = vld [vmem:[%s1232 + $0x8] sm:$0xff]
      %v1235 = vld [vmem:[%s1232 + $0x10] sm:$0xff]
      %v1236 = vld [vmem:[%s1232 + $0x18] sm:$0xff]
      %v1237 = vadd.f32 %v1035, %v1037
      %v1238 = vadd.f32 %v1237, %v1124
      %1239 = vadd.xlane.f32.xlu0 %v1238
      %v1240 = vpop.xlane.xlu0 %1239
      %v1241 = vadd.f32 %v1041, %v1043
      %v1242 = vadd.f32 %v1241, %v1129
      %1243 = vadd.xlane.f32.xlu0 %v1242
      %v1244 = vpop.xlane.xlu0 %1243
      %v1245 = vadd.f32 %v1047, %v1049
      %v1246 = vadd.f32 %v1245, %v1134
      %1247 = vadd.xlane.f32.xlu0 %v1246
      %v1248 = vpop.xlane.xlu0 %1247
      %v1249 = vadd.f32 %v1053, %v1055
      %v1250 = vadd.f32 %v1249, %v1139
      %1251 = vadd.xlane.f32.xlu0 %v1250
      %v1252 = vpop.xlane.xlu0 %1251
      %v1253 = vmul.f32 %v1209, 124.0
      %v1254 = vmul.f32 %v1214, 124.0
      %v1255 = vmul.f32 %v1219, 124.0
      %v1256 = vmul.f32 %v1224, 124.0
      %v1257 = vsub.f32 %v1240, %v1253
      %v1258 = vsub.f32 %v1244, %v1254
      %v1259 = vsub.f32 %v1248, %v1255
      %v1260 = vsub.f32 %v1252, %v1256
      %v1261 = vmul.f32 %v1035, %v1035
      %v1262 = vmul.f32 %v1037, %v1037
      %v1263 = vmul.f32 %v1124, %v1124
      %v1264 = vmul.f32 %v1041, %v1041
      %v1265 = vmul.f32 %v1043, %v1043
      %v1266 = vmul.f32 %v1129, %v1129
      %v1267 = vmul.f32 %v1047, %v1047
      %v1268 = vmul.f32 %v1049, %v1049
      %v1269 = vmul.f32 %v1134, %v1134
      %v1270 = vmul.f32 %v1053, %v1053
      %v1271 = vmul.f32 %v1055, %v1055
      %v1272 = vmul.f32 %v1139, %v1139
      %v1273 = vadd.f32 %v1261, %v1262
      %v1274 = vadd.f32 %v1273, %v1263
      %1275 = vadd.xlane.f32.xlu0 %v1274
      %v1276 = vpop.xlane.xlu0 %1275
      %v1277 = vadd.f32 %v1264, %v1265
      %v1278 = vadd.f32 %v1277, %v1266
      %1279 = vadd.xlane.f32.xlu0 %v1278
      %v1280 = vpop.xlane.xlu0 %1279
      %v1281 = vadd.f32 %v1267, %v1268
      %v1282 = vadd.f32 %v1281, %v1269
      %1283 = vadd.xlane.f32.xlu0 %v1282
      %v1284 = vpop.xlane.xlu0 %1283
      %v1285 = vadd.f32 %v1270, %v1271
      %v1286 = vadd.f32 %v1285, %v1272
      %1287 = vadd.xlane.f32.xlu0 %v1286
      %v1288 = vpop.xlane.xlu0 %1287
      %v1289 = vmul.f32 %v1209, %v1209
      %v1290 = vmul.f32 %v1214, %v1214
      %v1291 = vmul.f32 %v1219, %v1219
      %v1292 = vmul.f32 %v1224, %v1224
      %v1293 = vmul.f32 %v1289, 124.0
      %v1294 = vmul.f32 %v1290, 124.0
      %v1295 = vmul.f32 %v1291, 124.0
      %v1296 = vmul.f32 %v1292, 124.0
      %v1297 = vsub.f32 %v1276, %v1293
      %v1298 = vsub.f32 %v1280, %v1294
      %v1299 = vsub.f32 %v1284, %v1295
      %v1300 = vsub.f32 %v1288, %v1296
      %v1301 = vmul.f32 %v1257, 0.0038461538
      %v1302 = vmul.f32 %v1258, 0.0038461538
      %v1303 = vmul.f32 %v1259, 0.0038461538
      %v1304 = vmul.f32 %v1260, 0.0038461538
      %v1305 = vmul.f32 %v1297, 0.0038461538
      %v1306 = vmul.f32 %v1298, 0.0038461538
      %v1307 = vmul.f32 %v1299, 0.0038461538
      %v1308 = vmul.f32 %v1300, 0.0038461538
      %v1309 = vmul.f32 %v1301, %v1301
      %v1310 = vmul.f32 %v1302, %v1302
      %v1311 = vmul.f32 %v1303, %v1303
      %v1312 = vmul.f32 %v1304, %v1304
      %v1313 = vsub.f32 %v1305, %v1309
      %v1314 = vsub.f32 %v1306, %v1310
      %v1315 = vsub.f32 %v1307, %v1311
      %v1316 = vsub.f32 %v1308, %v1312
      %v1317 = vadd.f32 %v1313, 1e-05
      %v1318 = vadd.f32 %v1314, 1e-05
      %v1319 = vadd.f32 %v1315, 1e-05
      %v1320 = vadd.f32 %v1316, 1e-05
      %v1321 = vrsqrt.pop %v1317
      %v1322 = vrsqrt.pop %v1318
      %v1323 = vrsqrt.pop %v1319
      %v1324 = vrsqrt.pop %v1320
      %v1325 = vmul.f32 %v1228, %v1321
      %v1326 = vmul.f32 %v1229, %v1322
      %v1327 = vmul.f32 %v1230, %v1323
      %v1328 = vmul.f32 %v1231, %v1324
      %v1329 = vmul.f32 %v1301, %v1325
      %v1330 = vmul.f32 %v1302, %v1326
      %v1331 = vmul.f32 %v1303, %v1327
      %v1332 = vmul.f32 %v1304, %v1328
      %v1333 = vsub.f32 %v1233, %v1329
      %v1334 = vsub.f32 %v1234, %v1330
      %v1335 = vsub.f32 %v1235, %v1331
      %v1336 = vsub.f32 %v1236, %v1332
      %1338 = vset.pattern.permute.xlu0 0
      %1339 = vperm.xlu0 %1338, %v1325
      %v1340 = vpop.permute.xlu0 %1339
      %1343 = vset.pattern.permute.xlu0 0
      %1344 = vperm.xlu0 %1343, %v1326
      %v1345 = vpop.permute.xlu0 %1344
      %1348 = vset.pattern.permute.xlu0 0
      %1349 = vperm.xlu0 %1348, %v1327
      %v1350 = vpop.permute.xlu0 %1349
      %1353 = vset.pattern.permute.xlu0 0
      %1354 = vperm.xlu0 %1353, %v1328
      %v1355 = vpop.permute.xlu0 %1354
      %v1357 = vmul.f32 %v1035, %v1340
      %v1358 = vmul.f32 %v1037, %v1340
      %v1359 = vmul.f32 %v1124, %v1340
      %v1360 = vmul.f32 %v1041, %v1345
      %v1361 = vmul.f32 %v1043, %v1345
      %v1362 = vmul.f32 %v1129, %v1345
      %v1363 = vmul.f32 %v1047, %v1350
      %v1364 = vmul.f32 %v1049, %v1350
      %v1365 = vmul.f32 %v1134, %v1350
      %v1366 = vmul.f32 %v1053, %v1355
      %v1367 = vmul.f32 %v1055, %v1355
      %v1368 = vmul.f32 %v1139, %v1355
      %1370 = vset.pattern.permute.xlu0 0
      %1371 = vperm.xlu0 %1370, %v1333
      %v1372 = vpop.permute.xlu0 %1371
      %1375 = vset.pattern.permute.xlu0 0
      %1376 = vperm.xlu0 %1375, %v1334
      %v1377 = vpop.permute.xlu0 %1376
      %1380 = vset.pattern.permute.xlu0 0
      %1381 = vperm.xlu0 %1380, %v1335
      %v1382 = vpop.permute.xlu0 %1381
      %1385 = vset.pattern.permute.xlu0 0
      %1386 = vperm.xlu0 %1385, %v1336
      %v1387 = vpop.permute.xlu0 %1386
      %v1389 = vadd.f32 %v1357, %v1372
      %v1390 = vadd.f32 %v1358, %v1372
      %v1391 = vadd.f32 %v1359, %v1372
      %v1392 = vadd.f32 %v1360, %v1377
      %v1393 = vadd.f32 %v1361, %v1377
      %v1394 = vadd.f32 %v1362, %v1377
      %v1395 = vadd.f32 %v1363, %v1382
      %v1396 = vadd.f32 %v1364, %v1382
      %v1397 = vadd.f32 %v1365, %v1382
      %v1398 = vadd.f32 %v1366, %v1387
      %v1399 = vadd.f32 %v1367, %v1387
      %v1400 = vadd.f32 %v1368, %v1387
      %v1401 = vmul.f32 %v1209, %v1325
      %v1402 = vmul.f32 %v1214, %v1326
      %v1403 = vmul.f32 %v1219, %v1327
      %v1404 = vmul.f32 %v1224, %v1328
      %v1405 = vadd.f32 %v1401, %v1333
      %v1406 = vadd.f32 %v1402, %v1334
      %v1407 = vadd.f32 %v1403, %v1335
      %v1408 = vadd.f32 %v1404, %v1336
      %v1409 = vadd.f32 %v459, %v1389
      %v1410 = vadd.f32 %v460, %v1390
      %v1411 = vadd.f32 %v461, %v1391
      %v1412 = vadd.f32 %v462, %v1392
      %v1413 = vadd.f32 %v463, %v1393
      %v1414 = vadd.f32 %v464, %v1394
      %v1415 = vadd.f32 %v465, %v1395
      %v1416 = vadd.f32 %v466, %v1396
      %v1417 = vadd.f32 %v467, %v1397
      %v1418 = vadd.f32 %v468, %v1398
      %v1419 = vadd.f32 %v469, %v1399
      %v1420 = vadd.f32 %v470, %v1400
      %v1421 = vadd.f32 %v471, %v1405
      %v1422 = vadd.f32 %v472, %v1406
      %v1423 = vadd.f32 %v473, %v1407
      %v1424 = vadd.f32 %v474, %v1408
    $region58: #{tpu_custom_call.1} parent=1 // loop_footer
      %s458 = sadd.s32 1, %s454
    $region59: #{tpu_custom_call.1} parent=1 // loop_footer_branch
      %453 = sbr.rel target = $region55
    $region60: #{tpu_custom_call.1} parent=1 // loop_exit
      _
    %v1425 = vld [vmem:[%s10] sm:$0xff]
    %v1426 = vld [vmem:[%s10 + $0x8] sm:$0xff]
    %v1427 = vld [vmem:[%s11] sm:$0xff]
    %v1428 = vld [vmem:[%s11 + $0x8] sm:$0xff]
    %1430 = vset.pattern.permute.xlu0 0
    %1431 = vperm.xlu0 %1430, %v1427
    %v1432 = vpop.permute.xlu0 %1431
    %1435 = vset.pattern.permute.xlu0 0
    %1436 = vperm.xlu0 %1435, %v1428
    %v1437 = vpop.permute.xlu0 %1436
    %vm1439 = vcmask 261120
    %v1441 = vsel %vm1439, %v1425, 0
    %v1444 = vsel %vm1439, %v1426, 0
    %1446 = vmatprep.subr.mxu0 0.0
    %1447 = vmatpush1.msra.mxu0 0.0
    %1448 = vmatprep.subr.mxu0 0.0
    %1449 = vmatpush1.msra.mxu0 0.0
    %1450 = vmatprep.subr.mxu0 0.0
    %1451 = vmatpush1.msra.mxu0 0.0
    %1452 = vmatprep.subr.mxu0 0.0
    %1453 = vmatpush1.msra.mxu0 0.0
    %1454 = vmatprep.subr.mxu0 0.0
    %1455 = vmatpush1.msra.mxu0 0.0
    %1456 = vmatprep.subr.mxu0 0.0
    %1457 = vmatpush1.msra.mxu0 0.0
    %1458 = vmatprep.subr.mxu0 0.0
    %1459 = vmatpush1.msra.mxu0 0.0
    %1460 = vmatprep.subr.mxu0 0.0
    %1461 = vmatpush1.msra.mxu0 0.0
    %1462 = vmatprep.subr.mxu0 0.0
    %1463 = vmatpush1.msra.mxu0 0.0
    %1464 = vmatprep.subr.mxu0 0.0
    %1465 = vmatpush1.msra.mxu0 0.0
    %1466 = vmatprep.subr.mxu0 0.0
    %1467 = vmatpush1.msra.mxu0 0.0
    %1468 = vmatprep.subr.mxu0 0.0
    %1469 = vmatpush1.msra.mxu0 0.0
    %1470 = vmatprep.subr.mxu0 %v469
    %1471 = vmatpush1.msra.mxu0 %v468
    %1472 = vmatprep.subr.mxu0 %v466
    %1473 = vmatpush1.msra.mxu0 %v465
    %1474 = vmatprep.subr.mxu0 %v463
    %1475 = vmatpush1.msra.mxu0 %v462
    %1476 = vmatprep.subr.mxu0 %v460
    %1477 = vmatpush1.msra.mxu0 %v459
    %1478 = vmatprep.subr.mxu0 0.0
    %1479 = vmatpush2.msra.mxu0 0.0
    %1480 = vmatprep.subr.mxu0 0.0
    %1481 = vmatpush2.msra.mxu0 0.0
    %1482 = vmatprep.subr.mxu0 0.0
    %1483 = vmatpush2.msra.mxu0 0.0
    %1484 = vmatprep.subr.mxu0 0.0
    %1485 = vmatpush2.msra.mxu0 0.0
    %1486 = vmatprep.subr.mxu0 0.0
    %1487 = vmatpush2.msra.mxu0 0.0
    %1488 = vmatprep.subr.mxu0 0.0
    %1489 = vmatpush2.msra.mxu0 0.0
    %1490 = vmatprep.subr.mxu0 0.0
    %1491 = vmatpush2.msra.mxu0 0.0
    %1492 = vmatprep.subr.mxu0 0.0
    %1493 = vmatpush2.msra.mxu0 0.0
    %1494 = vmatprep.subr.mxu0 0.0
    %1495 = vmatpush2.msra.mxu0 0.0
    %1496 = vmatprep.subr.mxu0 0.0
    %1497 = vmatpush2.msra.mxu0 0.0
    %1498 = vmatprep.subr.mxu0 0.0
    %1499 = vmatpush2.msra.mxu0 0.0
    %1500 = vmatprep.subr.mxu0 0.0
    %1501 = vmatpush2.msra.mxu0 0.0
    %1502 = vmatprep.subr.mxu0 0.0
    %1503 = vmatpush2.msra.mxu0 0.0
    %1504 = vmatprep.subr.mxu0 0.0
    %1505 = vmatpush2.msra.mxu0 0.0
    %1506 = vmatprep.subr.mxu0 0.0
    %1507 = vmatpush2.msra.mxu0 0.0
    %1508 = vmatprep.subr.mxu0 0.0
    %1509 = vmatpush2.msra.mxu0 0.0
    %1510 = vmatprep.mubr.f32.mxu0 0.0
    %1511 = vmatmul.mubr.f32.gmra.mxu0 %v1441
    %v1512 = vpop.f32.mrf.mxu0
    %v1513 = vadd.f32 %v1432, %v1512
    %v1514 = vpop.f32.mrf.mxu0
    %v1515 = vadd.f32 %v1432, %v1514
    %1516 = vmatprep.mubr.f32.mxu0 0.0
    %1517 = vmatmul.mubr.f32.gmra.mxu0 %v1444
    %v1518 = vpop.f32.mrf.mxu0
    %v1519 = vadd.f32 %v1437, %v1518
    %v1520 = vpop.f32.mrf.mxu0
    %v1521 = vadd.f32 %v1437, %v1520
    %1522 = vdwg.mxu0
    %1523 = vmatprep.subr.mxu0 0.0
    %1524 = vmatpush1.msra.mxu0 0.0
    %1525 = vmatprep.subr.mxu0 0.0
    %1526 = vmatpush1.msra.mxu0 0.0
    %1527 = vmatprep.subr.mxu0 0.0
    %1528 = vmatpush1.msra.mxu0 0.0
    %1529 = vmatprep.subr.mxu0 0.0
    %1530 = vmatpush1.msra.mxu0 0.0
    %1531 = vmatprep.subr.mxu0 0.0
    %1532 = vmatpush1.msra.mxu0 0.0
    %1533 = vmatprep.subr.mxu0 0.0
    %1534 = vmatpush1.msra.mxu0 0.0
    %1535 = vmatprep.subr.mxu0 0.0
    %1536 = vmatpush1.msra.mxu0 0.0
    %1537 = vmatprep.subr.mxu0 0.0
    %1538 = vmatpush1.msra.mxu0 0.0
    %1539 = vmatprep.subr.mxu0 0.0
    %1540 = vmatpush1.msra.mxu0 0.0
    %1541 = vmatprep.subr.mxu0 0.0
    %1542 = vmatpush1.msra.mxu0 0.0
    %1543 = vmatprep.subr.mxu0 0.0
    %1544 = vmatpush1.msra.mxu0 0.0
    %1545 = vmatprep.subr.mxu0 0.0
    %1546 = vmatpush1.msra.mxu0 0.0
    %1547 = vmatprep.subr.mxu0 0.0
    %1548 = vmatpush1.msra.mxu0 %v470
    %1549 = vmatprep.subr.mxu0 0.0
    %1550 = vmatpush1.msra.mxu0 %v467
    %1551 = vmatprep.subr.mxu0 0.0
    %1552 = vmatpush1.msra.mxu0 %v464
    %1553 = vmatprep.subr.mxu0 0.0
    %1554 = vmatpush1.msra.mxu0 %v461
    %1555 = vmatprep.subr.mxu0 0.0
    %1556 = vmatpush2.msra.mxu0 0.0
    %1557 = vmatprep.subr.mxu0 0.0
    %1558 = vmatpush2.msra.mxu0 0.0
    %1559 = vmatprep.subr.mxu0 0.0
    %1560 = vmatpush2.msra.mxu0 0.0
    %1561 = vmatprep.subr.mxu0 0.0
    %1562 = vmatpush2.msra.mxu0 0.0
    %1563 = vmatprep.subr.mxu0 0.0
    %1564 = vmatpush2.msra.mxu0 0.0
    %1565 = vmatprep.subr.mxu0 0.0
    %1566 = vmatpush2.msra.mxu0 0.0
    %1567 = vmatprep.subr.mxu0 0.0
    %1568 = vmatpush2.msra.mxu0 0.0
    %1569 = vmatprep.subr.mxu0 0.0
    %1570 = vmatpush2.msra.mxu0 0.0
    %1571 = vmatprep.subr.mxu0 0.0
    %1572 = vmatpush2.msra.mxu0 0.0
    %1573 = vmatprep.subr.mxu0 0.0
    %1574 = vmatpush2.msra.mxu0 0.0
    %1575 = vmatprep.subr.mxu0 0.0
    %1576 = vmatpush2.msra.mxu0 0.0
    %1577 = vmatprep.subr.mxu0 0.0
    %1578 = vmatpush2.msra.mxu0 0.0
    %1579 = vmatprep.subr.mxu0 0.0
    %1580 = vmatpush2.msra.mxu0 0.0
    %1581 = vmatprep.subr.mxu0 0.0
    %1582 = vmatpush2.msra.mxu0 0.0
    %1583 = vmatprep.subr.mxu0 0.0
    %1584 = vmatpush2.msra.mxu0 0.0
    %1585 = vmatprep.subr.mxu0 0.0
    %1586 = vmatpush2.msra.mxu0 0.0
    %1587 = vmatprep.mubr.f32.mxu0 0.0
    %1588 = vmatmul.mubr.f32.gmra.mxu0 %v1441
    %v1589 = vpop.f32.mrf.mxu0
    %v1590 = vadd.f32 %v1432, %v1589
    %v1591 = vpop.f32.mrf.mxu0
    %1592 = vmatprep.mubr.f32.mxu0 0.0
    %1593 = vmatmul.mubr.f32.gmra.mxu0 %v1444
    %v1594 = vpop.f32.mrf.mxu0
    %v1595 = vadd.f32 %v1437, %v1594
    %v1596 = vpop.f32.mrf.mxu0
    %1597 = vdwg.mxu0
    %1598 = vst [vmem:[#allocation5] sm:$0xff] %v1513
    %1599 = vst [vmem:[#allocation5 + $0x8] sm:$0xff] %v1515
    %1600 = vst [vmem:[#allocation5 + $0x10] sm:$0xff] %v1590
    %1601 = vst [vmem:[#allocation5 + $0x18] sm:$0xff] %v1519
    %1602 = vst [vmem:[#allocation5 + $0x20] sm:$0xff] %v1521
    %1603 = vst [vmem:[#allocation5 + $0x28] sm:$0xff] %v1595
    // Predicated region
    $region61: #{tpu_custom_call.1} parent=1 // pred_check
      _
    $region62: #{tpu_custom_call.1} parent=1 // pred_check_branch
      %1605 = sbr.rel (0) target = $region64
    $region63: #{tpu_custom_call.1} parent=1 // pred_region
      %s1607 = ssub.s32 768, 768
      %1608 = vsyncadd [#allocation4], %s1607
      %s1609 = sshll.u32 [#allocation5], 4
      %s1610 = int_to_ptr.vmem [resolvable:$true] %s1609
      %1615 = dma.vmem_to_hbm [thread:$0]  %s1610, 768, %s12, [#allocation4], 384, 384, 24
    $region64: #{tpu_custom_call.1} parent=1 // pred_fallthru
      _
    // Predicated region
    $region65: #{tpu_custom_call.1} parent=1 // pred_check
      _
    $region66: #{tpu_custom_call.1} parent=1 // pred_check_branch
      %1617 = sbr.rel (0) target = $region68
    $region67: #{tpu_custom_call.1} parent=1 // pred_region
      %1618 = dma.done [#allocation4], 768
    $region68: #{tpu_custom_call.1} parent=1 // pred_fallthru
      _
    %1619 = vsyncpa [#allocation3], 1
    %1620 = vsyncpa [#allocation4], 1

</llo_original>
